<compile_context>
chip_gen: v7x
topology: tpu7x:2x2x1
jax: 0.10.0
libtpu: 0.0.40
codegen_flags: <defaults>
</compile_context>

<pallas_src>
import jax
import jax.numpy as jnp
from jax.experimental import pallas as pl
from jax.experimental.pallas import tpu as pltpu

H = 16            # hidden size
G = 4 * H         # gates per direction (64)
NUM_OUT = 3       # linear output features

# ---- packed parameter slab row layout (lane width = 8H = 128) ----------------
R_WIF = 0                       # layer0 fwd W_ih, placed in fwd gate columns
R_WIR = 1                       # layer0 rev W_ih, placed in rev gate columns
R_B0 = 2                        # layer0 combined bias (b_ih+b_hh, both dirs)
R_WHH0 = 3                      # layer0 block-diagonal W_hh  (2H rows)
R_WIH1 = R_WHH0 + 2 * H         # 35: layer1 W_ih   fwd cols 0:64, rev cols 64:128
R_WHH1F = R_WIH1 + 2 * H        # 67: layer1 fwd W_hh (H rows, cols 0:64)
R_B1 = R_WHH1F + H              # 83: layer1 biases  fwd cols 0:64, rev cols 64:128
R_WLIN = R_B1 + 1               # 84: linear weight  (2H rows, cols 0:NUM_OUT)
R_BLIN = R_WLIN + 2 * H         # 116: linear bias
SLAB_ROWS = 120                 # padded to a sublane multiple


# ------------------------------------------------------------------------------
# Pallas kernel: full forward pass in one invocation (no grid).
# Combined layer-0 gate column layout: [i_f,i_r, f_f,f_r, o_f,o_r, g_f,g_r].
# Gate columns for i/f/o are PRE-SCALED by 0.5 at pack time, so the cell uses
# a single tanh: sigmoid(z) = 0.5*tanh(0.5*z)+0.5.
# ------------------------------------------------------------------------------
def rnn_kernel(x_ref,        # (B, T)  lane-dense input (x[b, t] = scalar feature)
               p_ref,        # (SLAB_ROWS, 8H)  packed parameters (f32)
               out_ref):     # (B, 8H) lane-dense output; cols >= NUM_OUT are zero
    B = x_ref.shape[0]
    T = x_ref.shape[1]

    # ---- hoisted weight loads (static slices of the packed slab) -------------
    wif = p_ref[R_WIF:R_WIF + 1, :]                    # (1, 8H)
    wir = p_ref[R_WIR:R_WIR + 1, :]                    # (1, 8H)
    b0 = p_ref[R_B0:R_B0 + 1, :]                       # (1, 8H)
    # recurrent matmul weights cast to bf16 ONCE (single-pass MXU on the chain)
    whh0_bf = p_ref[R_WHH0:R_WHH0 + 2 * H, :].astype(jnp.bfloat16)        # (2H, 8H)
    whh1f_bf = p_ref[R_WHH1F:R_WHH1F + H, 0:G].astype(jnp.bfloat16)       # (H, 4H)
    wih1 = p_ref[R_WIH1:R_WIH1 + 2 * H, :]             # (2H, 8H) full 128 lanes
    b1 = p_ref[R_B1:R_B1 + 1, :]                       # (1, 8H)  fwd | rev
    wlin = p_ref[R_WLIN:R_WLIN + 2 * H, :]             # (2H, 8H) cols>=NUM_OUT are 0
    blin = p_ref[R_BLIN:R_BLIN + 1, :]                 # (1, 8H)

    # ---- layer-0 input projection, hoisted off the recurrent chain -----------
    # fwd columns use x[:, s], rev columns use x[:, T-1-s]; static indices only.
    gin0 = [x_ref[:, s:s + 1] * wif + x_ref[:, T - 1 - s:T - s] * wir + b0
            for s in range(T)]                          # list of (B, 8H)

    def fused_cell(gates, c, w):
        # gates arrive with i/f/o columns pre-scaled by 0.5 -> one tanh EUP push.
        t = jnp.tanh(gates)                             # (B, 4w)
        sig = t[:, 0:3 * w] * 0.5 + 0.5                 # sigmoid(i), sigmoid(f), sigmoid(o)
        i = sig[:, 0:w]
        f = sig[:, w:2 * w]
        o = sig[:, 2 * w:3 * w]
        g = t[:, 3 * w:4 * w]
        c_new = i * g if c is None else f * c + i * g   # c is None <=> zero init state
        h_new = o * jnp.tanh(c_new)
        return h_new, c_new

    # ---- layer 0: fwd + rev fused into one statically-unrolled recurrence ----
    h = None
    c = None
    hs = []                                             # per-step combined h, vreg-resident
    for s in range(T):                                  # unrolled; s is compile-time
        gates = gin0[s]
        if s > 0:                                       # skip dead zero-state matmul
            gates = gates + jnp.dot(h.astype(jnp.bfloat16), whh0_bf,
                                    preferred_element_type=jnp.float32)
        h, c = fused_cell(gates, c, 2 * H)
        hs.append(h)

    # ---- reorder rev half to time order (one-time, off the critical path) ----
    # out0[t] = [h_fwd(t) | h_rev(t)]; h_rev(t) was produced at combined step T-1-t.
    out0 = jnp.concatenate(
        [jnp.concatenate([hs[t][:, 0:H], hs[T - 1 - t][:, H:2 * H]], axis=-1)
         for t in range(T)], axis=0)                    # (T*B, 2H)

    # ---- layer-1 input projection: ONE full-128-lane matmul for BOTH dirs ----
    pre1 = jnp.dot(out0, wih1, preferred_element_type=jnp.float32) + b1   # (T*B, 8H)
    pre1_f = [pre1[t * B:(t + 1) * B, 0:G] for t in range(T)]             # fwd gate slabs

    # ---- layer 1, forward direction ------------------------------------------
    h1 = None
    c1 = None
    for t in range(T):                                  # unrolled
        gates = pre1_f[t]
        if t > 0:
            gates = gates + jnp.dot(h1.astype(jnp.bfloat16), whh1f_bf,
                                    preferred_element_type=jnp.float32)
        h1, c1 = fused_cell(gates, c1, H)

    # ---- layer 1, reverse direction: only t = T-1 is consumed ----------------
    # Exact only because the initial hidden/cell states are zero (PyTorch hx=None):
    # the reverse output at the last time step is its FIRST recurrent step.
    gates_r = pre1[(T - 1) * B:T * B, G:2 * G]          # (B, 4H), already has bias
    tr = jnp.tanh(gates_r)
    i_r = tr[:, 0:H] * 0.5 + 0.5
    o_r = tr[:, 2 * H:3 * H] * 0.5 + 0.5
    g_r = tr[:, 3 * H:4 * H]
    c_r = i_r * g_r                                     # f * c0 == 0
    h1r = o_r * jnp.tanh(c_r)

    # ---- final Linear (lane-dense 128-wide output, cols >= NUM_OUT are zero) --
    feat = jnp.concatenate([h1, h1r], axis=-1)          # (B, 2H)
    out_ref[...] = jnp.dot(feat, wlin, preferred_element_type=jnp.float32) + blin


# ------------------------------------------------------------------------------
# Parameter construction (PyTorch-shaped) and host-side packing.
# ------------------------------------------------------------------------------
def init_params(key):
    bound = 1.0 / (H ** 0.5)
    keys = jax.random.split(key, 18)

    def u(k_, shape):
        return jax.random.uniform(k_, shape, jnp.float32, -bound, bound)

    return {
        # layer 0 (input_size = 1)
        'w_ih_l0':  u(keys[0],  (4 * H, 1)),
        'w_hh_l0':  u(keys[1],  (4 * H, H)),
        'b_ih_l0':  u(keys[2],  (4 * H,)),
        'b_hh_l0':  u(keys[3],  (4 * H,)),
        'w_ih_l0r': u(keys[4],  (4 * H, 1)),
        'w_hh_l0r': u(keys[5],  (4 * H, H)),
        'b_ih_l0r': u(keys[6],  (4 * H,)),
        'b_hh_l0r': u(keys[7],  (4 * H,)),
        # layer 1 (input_size = 2H, bidirectional input)
        'w_ih_l1':  u(keys[8],  (4 * H, 2 * H)),
        'w_hh_l1':  u(keys[9],  (4 * H, H)),
        'b_ih_l1':  u(keys[10], (4 * H,)),
        'b_hh_l1':  u(keys[11], (4 * H,)),
        'w_ih_l1r': u(keys[12], (4 * H, 2 * H)),
        'w_hh_l1r': u(keys[13], (4 * H, H)),
        'b_ih_l1r': u(keys[14], (4 * H,)),
        'b_hh_l1r': u(keys[15], (4 * H,)),
        # linear(32 -> 3)
        'lin_w':    u(keys[16], (NUM_OUT, 2 * H)),
        'lin_b':    u(keys[17], (NUM_OUT,)),
    }


def _perm_cols(w):
    """Reorder PyTorch gate blocks [i, f, g, o] -> [i, f, o, g] along the last axis."""
    return jnp.concatenate(
        [w[..., 0:H], w[..., H:2 * H], w[..., 3 * H:4 * H], w[..., 2 * H:3 * H]], axis=-1)


def _interleave_dirs(vf, vr):
    """(..., 4H) fwd / rev (already in [i,f,o,g] order) -> (..., 8H) combined layout
    [i_f,i_r, f_f,f_r, o_f,o_r, g_f,g_r]."""
    parts = []
    for k in range(4):
        parts.append(vf[..., k * H:(k + 1) * H])
        parts.append(vr[..., k * H:(k + 1) * H])
    return jnp.concatenate(parts, axis=-1)


def _scale_sig(v, w):
    """Pre-scale the sigmoid-gate (i, f, o) columns by 0.5 so the kernel can use a
    single tanh per cell: sigmoid(z) = 0.5*tanh(0.5*z)+0.5."""
    return jnp.concatenate([v[..., 0:3 * w] * 0.5, v[..., 3 * w:]], axis=-1)


def pack_kernel_params(p):
    """Pack all weights into one lane-dense (SLAB_ROWS, 128) f32 slab. Called ONCE
    (outside the per-forward path) — the packing is static for inference."""
    zH4 = jnp.zeros((H, G), jnp.float32)
    z4 = jnp.zeros((G,), jnp.float32)

    # layer 0: fused fwd/rev, block-diagonal recurrent weights
    wif = _scale_sig(_interleave_dirs(_perm_cols(p['w_ih_l0'][:, 0]), z4), 2 * H)
    wir = _scale_sig(_interleave_dirs(z4, _perm_cols(p['w_ih_l0r'][:, 0])), 2 * H)
    b0 = _scale_sig(_interleave_dirs(_perm_cols(p['b_ih_l0'] + p['b_hh_l0']),
                                     _perm_cols(p['b_ih_l0r'] + p['b_hh_l0r'])), 2 * H)
    whh0 = _scale_sig(_interleave_dirs(
        jnp.concatenate([_perm_cols(p['w_hh_l0'].T), zH4], axis=0),      # fwd rows
        jnp.concatenate([zH4, _perm_cols(p['w_hh_l0r'].T)], axis=0)),    # rev rows
        2 * H)

    # layer 1 (w_hh_l1r intentionally not packed: reverse dir only needs its 1st step)
    wih1f = _scale_sig(_perm_cols(p['w_ih_l1'].T), H)
    wih1r = _scale_sig(_perm_cols(p['w_ih_l1r'].T), H)
    whh1f = _scale_sig(_perm_cols(p['w_hh_l1'].T), H)
    b1f = _scale_sig(_perm_cols(p['b_ih_l1'] + p['b_hh_l1']), H)
    b1r = _scale_sig(_perm_cols(p['b_ih_l1r'] + p['b_hh_l1r']), H)

    slab = jnp.zeros((SLAB_ROWS, 8 * H), jnp.float32)
    slab = slab.at[R_WIF, :].set(wif)
    slab = slab.at[R_WIR, :].set(wir)
    slab = slab.at[R_B0, :].set(b0)
    slab = slab.at[R_WHH0:R_WHH0 + 2 * H, :].set(whh0)
    slab = slab.at[R_WIH1:R_WIH1 + 2 * H, 0:G].set(wih1f)
    slab = slab.at[R_WIH1:R_WIH1 + 2 * H, G:2 * G].set(wih1r)
    slab = slab.at[R_WHH1F:R_WHH1F + H, 0:G].set(whh1f)
    slab = slab.at[R_B1, 0:G].set(b1f)
    slab = slab.at[R_B1, G:2 * G].set(b1r)
    slab = slab.at[R_WLIN:R_WLIN + 2 * H, 0:NUM_OUT].set(p['lin_w'].T)
    slab = slab.at[R_BLIN, 0:NUM_OUT].set(p['lin_b'])
    return slab


# ------------------------------------------------------------------------------
# Wrapper: only trivial layout glue in plain JAX; the slab is passed in pre-packed.
# ------------------------------------------------------------------------------
def rnn_forward(x, slab):
    """x: (B, 1, T) float32, like the PyTorch module's input. slab: packed params."""
    B, C, T = x.shape
    assert C == 1
    # permute(0,2,1) followed by the scalar input feature collapses to a (B, T) slab.
    x2d = x[:, 0, :]                                   # lane-dense (B, T)
    out_full = pl.pallas_call(
        rnn_kernel,
        out_shape=jax.ShapeDtypeStruct((B, 8 * H), jnp.float32),   # lane-dense output
        in_specs=[pl.BlockSpec(memory_space=pltpu.MemorySpace.VMEM)] * 2,
        out_specs=pl.BlockSpec(memory_space=pltpu.MemorySpace.VMEM),
    )(x2d, slab)
    return out_full[:, 0:NUM_OUT]


# ------------------------------------------------------------------------------
# Pure-JAX reference (mirrors torch.nn.LSTM semantics) for correctness check.
# ------------------------------------------------------------------------------
def _lstm_layer_ref(inp, w_ih, w_hh, b_ih, b_hh, reverse):
    B, T, _ = inp.shape
    seq = inp[:, ::-1, :] if reverse else inp
    h = jnp.zeros((B, H), jnp.float32)
    c = jnp.zeros((B, H), jnp.float32)
    outs = []
    for t in range(T):
        gates = seq[:, t, :] @ w_ih.T + h @ w_hh.T + b_ih + b_hh
        i = jax.nn.sigmoid(gates[:, :H])
        f = jax.nn.sigmoid(gates[:, H:2 * H])
        g = jnp.tanh(gates[:, 2 * H:3 * H])
        o = jax.nn.sigmoid(gates[:, 3 * H:])
        c = f * c + i * g
        h = o * jnp.tanh(c)
        outs.append(h)
    out = jnp.stack(outs, axis=1)
    return out[:, ::-1, :] if reverse else out


def ref_forward(x, p):
    xp = jnp.transpose(x, (0, 2, 1))
    o0f = _lstm_layer_ref(xp, p['w_ih_l0'], p['w_hh_l0'], p['b_ih_l0'], p['b_hh_l0'], False)
    o0r = _lstm_layer_ref(xp, p['w_ih_l0r'], p['w_hh_l0r'], p['b_ih_l0r'], p['b_hh_l0r'], True)
    o0 = jnp.concatenate([o0f, o0r], axis=-1)
    o1f = _lstm_layer_ref(o0, p['w_ih_l1'], p['w_hh_l1'], p['b_ih_l1'], p['b_hh_l1'], False)
    o1r = _lstm_layer_ref(o0, p['w_ih_l1r'], p['w_hh_l1r'], p['b_ih_l1r'], p['b_hh_l1r'], True)
    o1 = jnp.concatenate([o1f, o1r], axis=-1)
    last = o1[:, -1, :]
    return last @ p['lin_w'].T + p['lin_b']


if __name__ == "__main__":
    key = jax.random.PRNGKey(0)
    k_params, k_x = jax.random.split(key)

    B, T = 2, 8
    params = init_params(k_params)
    x = jax.random.normal(k_x, (B, 1, T), jnp.float32)   # (batch, channels=1, seq)

    # Pack the parameter slab ONCE (out of the per-call path).
    slab = jax.block_until_ready(pack_kernel_params(params))

    fwd = jax.jit(rnn_forward)
    out = jax.block_until_ready(fwd(x, slab))
    ref = ref_forward(x, params)

    assert out.shape == (B, NUM_OUT)
    # Tolerance loosened vs the pure-f32 reference: the recurrent matmul operands
    # are bf16 (f32 accumulation), which is a deliberate precision/latency tradeoff.
    assert jnp.allclose(out, ref, atol=5e-2, rtol=5e-2), (out, ref)

    print("KERNEL_OK")
</pallas_src>

<mosaic_0001>
module attributes {stable_mosaic.version = 11 : i64} {
  func.func @rnn_kernel(%arg0: memref<2x8xf32, #tpu.memory_space<vmem>>, %arg1: memref<120x128xf32, #tpu.memory_space<vmem>>, %arg2: memref<2x128xf32, #tpu.memory_space<vmem>>) attributes {dimension_semantics = [], scalar_prefetch = 0 : i64, scratch_operands = 0 : i64, tpu.core_type = #tpu.core_type<tc>} {
    %c0 = arith.constant 0 : index
    %c0_0 = arith.constant 0 : index
    %0 = vector.load %arg1[%c0, %c0_0] : memref<120x128xf32, #tpu.memory_space<vmem>>, vector<1x128xf32>
    %c1 = arith.constant 1 : index
    %c0_1 = arith.constant 0 : index
    %1 = vector.load %arg1[%c1, %c0_1] : memref<120x128xf32, #tpu.memory_space<vmem>>, vector<1x128xf32>
    %c2 = arith.constant 2 : index
    %c0_2 = arith.constant 0 : index
    %2 = vector.load %arg1[%c2, %c0_2] : memref<120x128xf32, #tpu.memory_space<vmem>>, vector<1x128xf32>
    %c3 = arith.constant 3 : index
    %c0_3 = arith.constant 0 : index
    %3 = vector.load %arg1[%c3, %c0_3] : memref<120x128xf32, #tpu.memory_space<vmem>>, vector<32x128xf32>
    %4 = arith.truncf %3 : vector<32x128xf32> to vector<32x128xbf16>
    %c67 = arith.constant 67 : index
    %c0_4 = arith.constant 0 : index
    %5 = vector.load %arg1[%c67, %c0_4] : memref<120x128xf32, #tpu.memory_space<vmem>>, vector<16x64xf32>
    %6 = arith.truncf %5 : vector<16x64xf32> to vector<16x64xbf16>
    %c35 = arith.constant 35 : index
    %c0_5 = arith.constant 0 : index
    %7 = vector.load %arg1[%c35, %c0_5] : memref<120x128xf32, #tpu.memory_space<vmem>>, vector<32x128xf32>
    %c83 = arith.constant 83 : index
    %c0_6 = arith.constant 0 : index
    %8 = vector.load %arg1[%c83, %c0_6] : memref<120x128xf32, #tpu.memory_space<vmem>>, vector<1x128xf32>
    %c84 = arith.constant 84 : index
    %c0_7 = arith.constant 0 : index
    %9 = vector.load %arg1[%c84, %c0_7] : memref<120x128xf32, #tpu.memory_space<vmem>>, vector<32x128xf32>
    %c116 = arith.constant 116 : index
    %c0_8 = arith.constant 0 : index
    %10 = vector.load %arg1[%c116, %c0_8] : memref<120x128xf32, #tpu.memory_space<vmem>>, vector<1x128xf32>
    %c0_9 = arith.constant 0 : index
    %c0_10 = arith.constant 0 : index
    %11 = vector.load %arg0[%c0_9, %c0_10] : memref<2x8xf32, #tpu.memory_space<vmem>>, vector<2x1xf32>
    %12 = vector.broadcast %11 : vector<2x1xf32> to vector<2x128xf32>
    %13 = vector.broadcast %0 : vector<1x128xf32> to vector<2x128xf32>
    %14 = arith.mulf %12, %13 : vector<2x128xf32>
    %c0_11 = arith.constant 0 : index
    %c7 = arith.constant 7 : index
    %15 = vector.load %arg0[%c0_11, %c7] : memref<2x8xf32, #tpu.memory_space<vmem>>, vector<2x1xf32>
    %16 = vector.broadcast %15 : vector<2x1xf32> to vector<2x128xf32>
    %17 = vector.broadcast %1 : vector<1x128xf32> to vector<2x128xf32>
    %18 = arith.mulf %16, %17 : vector<2x128xf32>
    %19 = arith.addf %14, %18 : vector<2x128xf32>
    %20 = vector.broadcast %2 : vector<1x128xf32> to vector<2x128xf32>
    %21 = arith.addf %19, %20 : vector<2x128xf32>
    %c0_12 = arith.constant 0 : index
    %c1_13 = arith.constant 1 : index
    %22 = vector.load %arg0[%c0_12, %c1_13] : memref<2x8xf32, #tpu.memory_space<vmem>>, vector<2x1xf32>
    %23 = vector.broadcast %22 : vector<2x1xf32> to vector<2x128xf32>
    %24 = vector.broadcast %0 : vector<1x128xf32> to vector<2x128xf32>
    %25 = arith.mulf %23, %24 : vector<2x128xf32>
    %c0_14 = arith.constant 0 : index
    %c6 = arith.constant 6 : index
    %26 = vector.load %arg0[%c0_14, %c6] : memref<2x8xf32, #tpu.memory_space<vmem>>, vector<2x1xf32>
    %27 = vector.broadcast %26 : vector<2x1xf32> to vector<2x128xf32>
    %28 = vector.broadcast %1 : vector<1x128xf32> to vector<2x128xf32>
    %29 = arith.mulf %27, %28 : vector<2x128xf32>
    %30 = arith.addf %25, %29 : vector<2x128xf32>
    %31 = vector.broadcast %2 : vector<1x128xf32> to vector<2x128xf32>
    %32 = arith.addf %30, %31 : vector<2x128xf32>
    %c0_15 = arith.constant 0 : index
    %c2_16 = arith.constant 2 : index
    %33 = vector.load %arg0[%c0_15, %c2_16] : memref<2x8xf32, #tpu.memory_space<vmem>>, vector<2x1xf32>
    %34 = vector.broadcast %33 : vector<2x1xf32> to vector<2x128xf32>
    %35 = vector.broadcast %0 : vector<1x128xf32> to vector<2x128xf32>
    %36 = arith.mulf %34, %35 : vector<2x128xf32>
    %c0_17 = arith.constant 0 : index
    %c5 = arith.constant 5 : index
    %37 = vector.load %arg0[%c0_17, %c5] : memref<2x8xf32, #tpu.memory_space<vmem>>, vector<2x1xf32>
    %38 = vector.broadcast %37 : vector<2x1xf32> to vector<2x128xf32>
    %39 = vector.broadcast %1 : vector<1x128xf32> to vector<2x128xf32>
    %40 = arith.mulf %38, %39 : vector<2x128xf32>
    %41 = arith.addf %36, %40 : vector<2x128xf32>
    %42 = vector.broadcast %2 : vector<1x128xf32> to vector<2x128xf32>
    %43 = arith.addf %41, %42 : vector<2x128xf32>
    %c0_18 = arith.constant 0 : index
    %c3_19 = arith.constant 3 : index
    %44 = vector.load %arg0[%c0_18, %c3_19] : memref<2x8xf32, #tpu.memory_space<vmem>>, vector<2x1xf32>
    %45 = vector.broadcast %44 : vector<2x1xf32> to vector<2x128xf32>
    %46 = vector.broadcast %0 : vector<1x128xf32> to vector<2x128xf32>
    %47 = arith.mulf %45, %46 : vector<2x128xf32>
    %c0_20 = arith.constant 0 : index
    %c4 = arith.constant 4 : index
    %48 = vector.load %arg0[%c0_20, %c4] : memref<2x8xf32, #tpu.memory_space<vmem>>, vector<2x1xf32>
    %49 = vector.broadcast %48 : vector<2x1xf32> to vector<2x128xf32>
    %50 = vector.broadcast %1 : vector<1x128xf32> to vector<2x128xf32>
    %51 = arith.mulf %49, %50 : vector<2x128xf32>
    %52 = arith.addf %47, %51 : vector<2x128xf32>
    %53 = vector.broadcast %2 : vector<1x128xf32> to vector<2x128xf32>
    %54 = arith.addf %52, %53 : vector<2x128xf32>
    %c0_21 = arith.constant 0 : index
    %c4_22 = arith.constant 4 : index
    %55 = vector.load %arg0[%c0_21, %c4_22] : memref<2x8xf32, #tpu.memory_space<vmem>>, vector<2x1xf32>
    %56 = vector.broadcast %55 : vector<2x1xf32> to vector<2x128xf32>
    %57 = vector.broadcast %0 : vector<1x128xf32> to vector<2x128xf32>
    %58 = arith.mulf %56, %57 : vector<2x128xf32>
    %c0_23 = arith.constant 0 : index
    %c3_24 = arith.constant 3 : index
    %59 = vector.load %arg0[%c0_23, %c3_24] : memref<2x8xf32, #tpu.memory_space<vmem>>, vector<2x1xf32>
    %60 = vector.broadcast %59 : vector<2x1xf32> to vector<2x128xf32>
    %61 = vector.broadcast %1 : vector<1x128xf32> to vector<2x128xf32>
    %62 = arith.mulf %60, %61 : vector<2x128xf32>
    %63 = arith.addf %58, %62 : vector<2x128xf32>
    %64 = vector.broadcast %2 : vector<1x128xf32> to vector<2x128xf32>
    %65 = arith.addf %63, %64 : vector<2x128xf32>
    %c0_25 = arith.constant 0 : index
    %c5_26 = arith.constant 5 : index
    %66 = vector.load %arg0[%c0_25, %c5_26] : memref<2x8xf32, #tpu.memory_space<vmem>>, vector<2x1xf32>
    %67 = vector.broadcast %66 : vector<2x1xf32> to vector<2x128xf32>
    %68 = vector.broadcast %0 : vector<1x128xf32> to vector<2x128xf32>
    %69 = arith.mulf %67, %68 : vector<2x128xf32>
    %c0_27 = arith.constant 0 : index
    %c2_28 = arith.constant 2 : index
    %70 = vector.load %arg0[%c0_27, %c2_28] : memref<2x8xf32, #tpu.memory_space<vmem>>, vector<2x1xf32>
    %71 = vector.broadcast %70 : vector<2x1xf32> to vector<2x128xf32>
    %72 = vector.broadcast %1 : vector<1x128xf32> to vector<2x128xf32>
    %73 = arith.mulf %71, %72 : vector<2x128xf32>
    %74 = arith.addf %69, %73 : vector<2x128xf32>
    %75 = vector.broadcast %2 : vector<1x128xf32> to vector<2x128xf32>
    %76 = arith.addf %74, %75 : vector<2x128xf32>
    %c0_29 = arith.constant 0 : index
    %c6_30 = arith.constant 6 : index
    %77 = vector.load %arg0[%c0_29, %c6_30] : memref<2x8xf32, #tpu.memory_space<vmem>>, vector<2x1xf32>
    %78 = vector.broadcast %77 : vector<2x1xf32> to vector<2x128xf32>
    %79 = vector.broadcast %0 : vector<1x128xf32> to vector<2x128xf32>
    %80 = arith.mulf %78, %79 : vector<2x128xf32>
    %c0_31 = arith.constant 0 : index
    %c1_32 = arith.constant 1 : index
    %81 = vector.load %arg0[%c0_31, %c1_32] : memref<2x8xf32, #tpu.memory_space<vmem>>, vector<2x1xf32>
    %82 = vector.broadcast %81 : vector<2x1xf32> to vector<2x128xf32>
    %83 = vector.broadcast %1 : vector<1x128xf32> to vector<2x128xf32>
    %84 = arith.mulf %82, %83 : vector<2x128xf32>
    %85 = arith.addf %80, %84 : vector<2x128xf32>
    %86 = vector.broadcast %2 : vector<1x128xf32> to vector<2x128xf32>
    %87 = arith.addf %85, %86 : vector<2x128xf32>
    %c0_33 = arith.constant 0 : index
    %c7_34 = arith.constant 7 : index
    %88 = vector.load %arg0[%c0_33, %c7_34] : memref<2x8xf32, #tpu.memory_space<vmem>>, vector<2x1xf32>
    %89 = vector.broadcast %88 : vector<2x1xf32> to vector<2x128xf32>
    %90 = vector.broadcast %0 : vector<1x128xf32> to vector<2x128xf32>
    %91 = arith.mulf %89, %90 : vector<2x128xf32>
    %c0_35 = arith.constant 0 : index
    %c0_36 = arith.constant 0 : index
    %92 = vector.load %arg0[%c0_35, %c0_36] : memref<2x8xf32, #tpu.memory_space<vmem>>, vector<2x1xf32>
    %93 = vector.broadcast %92 : vector<2x1xf32> to vector<2x128xf32>
    %94 = vector.broadcast %1 : vector<1x128xf32> to vector<2x128xf32>
    %95 = arith.mulf %93, %94 : vector<2x128xf32>
    %96 = arith.addf %91, %95 : vector<2x128xf32>
    %97 = vector.broadcast %2 : vector<1x128xf32> to vector<2x128xf32>
    %98 = arith.addf %96, %97 : vector<2x128xf32>
    %99 = math.tanh %21 : vector<2x128xf32>
    %100 = vector.extract_strided_slice %99 {offsets = [0, 0], sizes = [2, 96], strides = [1, 1]} : vector<2x128xf32> to vector<2x96xf32>
    %cst = arith.constant 5.000000e-01 : f32
    %101 = vector.broadcast %cst : f32 to vector<2x96xf32>
    %102 = arith.mulf %100, %101 : vector<2x96xf32>
    %cst_37 = arith.constant 5.000000e-01 : f32
    %103 = vector.broadcast %cst_37 : f32 to vector<2x96xf32>
    %104 = arith.addf %102, %103 : vector<2x96xf32>
    %105 = vector.extract_strided_slice %104 {offsets = [0, 0], sizes = [2, 32], strides = [1, 1]} : vector<2x96xf32> to vector<2x32xf32>
    %106 = vector.extract_strided_slice %104 {offsets = [0, 64], sizes = [2, 32], strides = [1, 1]} : vector<2x96xf32> to vector<2x32xf32>
    %107 = vector.extract_strided_slice %99 {offsets = [0, 96], sizes = [2, 32], strides = [1, 1]} : vector<2x128xf32> to vector<2x32xf32>
    %108 = arith.mulf %105, %107 : vector<2x32xf32>
    %109 = math.tanh %108 : vector<2x32xf32>
    %110 = arith.mulf %106, %109 : vector<2x32xf32>
    %111 = arith.truncf %110 : vector<2x32xf32> to vector<2x32xbf16>
    %cst_38 = arith.constant dense<0.000000e+00> : vector<2x128xf32>
    %112 = tpu.matmul %111, %4, %cst_38 {dimension_numbers = #tpu.dot_dimension_numbers<[1], [0], [0], [1], [0, 0, 1, 1], [], []>} : vector<2x32xbf16>, vector<32x128xbf16>, vector<2x128xf32> -> vector<2x128xf32>
    %113 = arith.addf %32, %112 : vector<2x128xf32>
    %114 = math.tanh %113 : vector<2x128xf32>
    %115 = vector.extract_strided_slice %114 {offsets = [0, 0], sizes = [2, 96], strides = [1, 1]} : vector<2x128xf32> to vector<2x96xf32>
    %cst_39 = arith.constant 5.000000e-01 : f32
    %116 = vector.broadcast %cst_39 : f32 to vector<2x96xf32>
    %117 = arith.mulf %115, %116 : vector<2x96xf32>
    %cst_40 = arith.constant 5.000000e-01 : f32
    %118 = vector.broadcast %cst_40 : f32 to vector<2x96xf32>
    %119 = arith.addf %117, %118 : vector<2x96xf32>
    %120 = vector.extract_strided_slice %119 {offsets = [0, 0], sizes = [2, 32], strides = [1, 1]} : vector<2x96xf32> to vector<2x32xf32>
    %121 = vector.extract_strided_slice %119 {offsets = [0, 32], sizes = [2, 32], strides = [1, 1]} : vector<2x96xf32> to vector<2x32xf32>
    %122 = vector.extract_strided_slice %119 {offsets = [0, 64], sizes = [2, 32], strides = [1, 1]} : vector<2x96xf32> to vector<2x32xf32>
    %123 = vector.extract_strided_slice %114 {offsets = [0, 96], sizes = [2, 32], strides = [1, 1]} : vector<2x128xf32> to vector<2x32xf32>
    %124 = arith.mulf %121, %108 : vector<2x32xf32>
    %125 = arith.mulf %120, %123 : vector<2x32xf32>
    %126 = arith.addf %124, %125 : vector<2x32xf32>
    %127 = math.tanh %126 : vector<2x32xf32>
    %128 = arith.mulf %122, %127 : vector<2x32xf32>
    %129 = arith.truncf %128 : vector<2x32xf32> to vector<2x32xbf16>
    %cst_41 = arith.constant dense<0.000000e+00> : vector<2x128xf32>
    %130 = tpu.matmul %129, %4, %cst_41 {dimension_numbers = #tpu.dot_dimension_numbers<[1], [0], [0], [1], [0, 0, 1, 1], [], []>} : vector<2x32xbf16>, vector<32x128xbf16>, vector<2x128xf32> -> vector<2x128xf32>
    %131 = arith.addf %43, %130 : vector<2x128xf32>
    %132 = math.tanh %131 : vector<2x128xf32>
    %133 = vector.extract_strided_slice %132 {offsets = [0, 0], sizes = [2, 96], strides = [1, 1]} : vector<2x128xf32> to vector<2x96xf32>
    %cst_42 = arith.constant 5.000000e-01 : f32
    %134 = vector.broadcast %cst_42 : f32 to vector<2x96xf32>
    %135 = arith.mulf %133, %134 : vector<2x96xf32>
    %cst_43 = arith.constant 5.000000e-01 : f32
    %136 = vector.broadcast %cst_43 : f32 to vector<2x96xf32>
    %137 = arith.addf %135, %136 : vector<2x96xf32>
    %138 = vector.extract_strided_slice %137 {offsets = [0, 0], sizes = [2, 32], strides = [1, 1]} : vector<2x96xf32> to vector<2x32xf32>
    %139 = vector.extract_strided_slice %137 {offsets = [0, 32], sizes = [2, 32], strides = [1, 1]} : vector<2x96xf32> to vector<2x32xf32>
    %140 = vector.extract_strided_slice %137 {offsets = [0, 64], sizes = [2, 32], strides = [1, 1]} : vector<2x96xf32> to vector<2x32xf32>
    %141 = vector.extract_strided_slice %132 {offsets = [0, 96], sizes = [2, 32], strides = [1, 1]} : vector<2x128xf32> to vector<2x32xf32>
    %142 = arith.mulf %139, %126 : vector<2x32xf32>
    %143 = arith.mulf %138, %141 : vector<2x32xf32>
    %144 = arith.addf %142, %143 : vector<2x32xf32>
    %145 = math.tanh %144 : vector<2x32xf32>
    %146 = arith.mulf %140, %145 : vector<2x32xf32>
    %147 = arith.truncf %146 : vector<2x32xf32> to vector<2x32xbf16>
    %cst_44 = arith.constant dense<0.000000e+00> : vector<2x128xf32>
    %148 = tpu.matmul %147, %4, %cst_44 {dimension_numbers = #tpu.dot_dimension_numbers<[1], [0], [0], [1], [0, 0, 1, 1], [], []>} : vector<2x32xbf16>, vector<32x128xbf16>, vector<2x128xf32> -> vector<2x128xf32>
    %149 = arith.addf %54, %148 : vector<2x128xf32>
    %150 = math.tanh %149 : vector<2x128xf32>
    %151 = vector.extract_strided_slice %150 {offsets = [0, 0], sizes = [2, 96], strides = [1, 1]} : vector<2x128xf32> to vector<2x96xf32>
    %cst_45 = arith.constant 5.000000e-01 : f32
    %152 = vector.broadcast %cst_45 : f32 to vector<2x96xf32>
    %153 = arith.mulf %151, %152 : vector<2x96xf32>
    %cst_46 = arith.constant 5.000000e-01 : f32
    %154 = vector.broadcast %cst_46 : f32 to vector<2x96xf32>
    %155 = arith.addf %153, %154 : vector<2x96xf32>
    %156 = vector.extract_strided_slice %155 {offsets = [0, 0], sizes = [2, 32], strides = [1, 1]} : vector<2x96xf32> to vector<2x32xf32>
    %157 = vector.extract_strided_slice %155 {offsets = [0, 32], sizes = [2, 32], strides = [1, 1]} : vector<2x96xf32> to vector<2x32xf32>
    %158 = vector.extract_strided_slice %155 {offsets = [0, 64], sizes = [2, 32], strides = [1, 1]} : vector<2x96xf32> to vector<2x32xf32>
    %159 = vector.extract_strided_slice %150 {offsets = [0, 96], sizes = [2, 32], strides = [1, 1]} : vector<2x128xf32> to vector<2x32xf32>
    %160 = arith.mulf %157, %144 : vector<2x32xf32>
    %161 = arith.mulf %156, %159 : vector<2x32xf32>
    %162 = arith.addf %160, %161 : vector<2x32xf32>
    %163 = math.tanh %162 : vector<2x32xf32>
    %164 = arith.mulf %158, %163 : vector<2x32xf32>
    %165 = arith.truncf %164 : vector<2x32xf32> to vector<2x32xbf16>
    %cst_47 = arith.constant dense<0.000000e+00> : vector<2x128xf32>
    %166 = tpu.matmul %165, %4, %cst_47 {dimension_numbers = #tpu.dot_dimension_numbers<[1], [0], [0], [1], [0, 0, 1, 1], [], []>} : vector<2x32xbf16>, vector<32x128xbf16>, vector<2x128xf32> -> vector<2x128xf32>
    %167 = arith.addf %65, %166 : vector<2x128xf32>
    %168 = math.tanh %167 : vector<2x128xf32>
    %169 = vector.extract_strided_slice %168 {offsets = [0, 0], sizes = [2, 96], strides = [1, 1]} : vector<2x128xf32> to vector<2x96xf32>
    %cst_48 = arith.constant 5.000000e-01 : f32
    %170 = vector.broadcast %cst_48 : f32 to vector<2x96xf32>
    %171 = arith.mulf %169, %170 : vector<2x96xf32>
    %cst_49 = arith.constant 5.000000e-01 : f32
    %172 = vector.broadcast %cst_49 : f32 to vector<2x96xf32>
    %173 = arith.addf %171, %172 : vector<2x96xf32>
    %174 = vector.extract_strided_slice %173 {offsets = [0, 0], sizes = [2, 32], strides = [1, 1]} : vector<2x96xf32> to vector<2x32xf32>
    %175 = vector.extract_strided_slice %173 {offsets = [0, 32], sizes = [2, 32], strides = [1, 1]} : vector<2x96xf32> to vector<2x32xf32>
    %176 = vector.extract_strided_slice %173 {offsets = [0, 64], sizes = [2, 32], strides = [1, 1]} : vector<2x96xf32> to vector<2x32xf32>
    %177 = vector.extract_strided_slice %168 {offsets = [0, 96], sizes = [2, 32], strides = [1, 1]} : vector<2x128xf32> to vector<2x32xf32>
    %178 = arith.mulf %175, %162 : vector<2x32xf32>
    %179 = arith.mulf %174, %177 : vector<2x32xf32>
    %180 = arith.addf %178, %179 : vector<2x32xf32>
    %181 = math.tanh %180 : vector<2x32xf32>
    %182 = arith.mulf %176, %181 : vector<2x32xf32>
    %183 = arith.truncf %182 : vector<2x32xf32> to vector<2x32xbf16>
    %cst_50 = arith.constant dense<0.000000e+00> : vector<2x128xf32>
    %184 = tpu.matmul %183, %4, %cst_50 {dimension_numbers = #tpu.dot_dimension_numbers<[1], [0], [0], [1], [0, 0, 1, 1], [], []>} : vector<2x32xbf16>, vector<32x128xbf16>, vector<2x128xf32> -> vector<2x128xf32>
    %185 = arith.addf %76, %184 : vector<2x128xf32>
    %186 = math.tanh %185 : vector<2x128xf32>
    %187 = vector.extract_strided_slice %186 {offsets = [0, 0], sizes = [2, 96], strides = [1, 1]} : vector<2x128xf32> to vector<2x96xf32>
    %cst_51 = arith.constant 5.000000e-01 : f32
    %188 = vector.broadcast %cst_51 : f32 to vector<2x96xf32>
    %189 = arith.mulf %187, %188 : vector<2x96xf32>
    %cst_52 = arith.constant 5.000000e-01 : f32
    %190 = vector.broadcast %cst_52 : f32 to vector<2x96xf32>
    %191 = arith.addf %189, %190 : vector<2x96xf32>
    %192 = vector.extract_strided_slice %191 {offsets = [0, 0], sizes = [2, 32], strides = [1, 1]} : vector<2x96xf32> to vector<2x32xf32>
    %193 = vector.extract_strided_slice %191 {offsets = [0, 32], sizes = [2, 32], strides = [1, 1]} : vector<2x96xf32> to vector<2x32xf32>
    %194 = vector.extract_strided_slice %191 {offsets = [0, 64], sizes = [2, 32], strides = [1, 1]} : vector<2x96xf32> to vector<2x32xf32>
    %195 = vector.extract_strided_slice %186 {offsets = [0, 96], sizes = [2, 32], strides = [1, 1]} : vector<2x128xf32> to vector<2x32xf32>
    %196 = arith.mulf %193, %180 : vector<2x32xf32>
    %197 = arith.mulf %192, %195 : vector<2x32xf32>
    %198 = arith.addf %196, %197 : vector<2x32xf32>
    %199 = math.tanh %198 : vector<2x32xf32>
    %200 = arith.mulf %194, %199 : vector<2x32xf32>
    %201 = arith.truncf %200 : vector<2x32xf32> to vector<2x32xbf16>
    %cst_53 = arith.constant dense<0.000000e+00> : vector<2x128xf32>
    %202 = tpu.matmul %201, %4, %cst_53 {dimension_numbers = #tpu.dot_dimension_numbers<[1], [0], [0], [1], [0, 0, 1, 1], [], []>} : vector<2x32xbf16>, vector<32x128xbf16>, vector<2x128xf32> -> vector<2x128xf32>
    %203 = arith.addf %87, %202 : vector<2x128xf32>
    %204 = math.tanh %203 : vector<2x128xf32>
    %205 = vector.extract_strided_slice %204 {offsets = [0, 0], sizes = [2, 96], strides = [1, 1]} : vector<2x128xf32> to vector<2x96xf32>
    %cst_54 = arith.constant 5.000000e-01 : f32
    %206 = vector.broadcast %cst_54 : f32 to vector<2x96xf32>
    %207 = arith.mulf %205, %206 : vector<2x96xf32>
    %cst_55 = arith.constant 5.000000e-01 : f32
    %208 = vector.broadcast %cst_55 : f32 to vector<2x96xf32>
    %209 = arith.addf %207, %208 : vector<2x96xf32>
    %210 = vector.extract_strided_slice %209 {offsets = [0, 0], sizes = [2, 32], strides = [1, 1]} : vector<2x96xf32> to vector<2x32xf32>
    %211 = vector.extract_strided_slice %209 {offsets = [0, 32], sizes = [2, 32], strides = [1, 1]} : vector<2x96xf32> to vector<2x32xf32>
    %212 = vector.extract_strided_slice %209 {offsets = [0, 64], sizes = [2, 32], strides = [1, 1]} : vector<2x96xf32> to vector<2x32xf32>
    %213 = vector.extract_strided_slice %204 {offsets = [0, 96], sizes = [2, 32], strides = [1, 1]} : vector<2x128xf32> to vector<2x32xf32>
    %214 = arith.mulf %211, %198 : vector<2x32xf32>
    %215 = arith.mulf %210, %213 : vector<2x32xf32>
    %216 = arith.addf %214, %215 : vector<2x32xf32>
    %217 = math.tanh %216 : vector<2x32xf32>
    %218 = arith.mulf %212, %217 : vector<2x32xf32>
    %219 = arith.truncf %218 : vector<2x32xf32> to vector<2x32xbf16>
    %cst_56 = arith.constant dense<0.000000e+00> : vector<2x128xf32>
    %220 = tpu.matmul %219, %4, %cst_56 {dimension_numbers = #tpu.dot_dimension_numbers<[1], [0], [0], [1], [0, 0, 1, 1], [], []>} : vector<2x32xbf16>, vector<32x128xbf16>, vector<2x128xf32> -> vector<2x128xf32>
    %221 = arith.addf %98, %220 : vector<2x128xf32>
    %222 = math.tanh %221 : vector<2x128xf32>
    %223 = vector.extract_strided_slice %222 {offsets = [0, 0], sizes = [2, 96], strides = [1, 1]} : vector<2x128xf32> to vector<2x96xf32>
    %cst_57 = arith.constant 5.000000e-01 : f32
    %224 = vector.broadcast %cst_57 : f32 to vector<2x96xf32>
    %225 = arith.mulf %223, %224 : vector<2x96xf32>
    %cst_58 = arith.constant 5.000000e-01 : f32
    %226 = vector.broadcast %cst_58 : f32 to vector<2x96xf32>
    %227 = arith.addf %225, %226 : vector<2x96xf32>
    %228 = vector.extract_strided_slice %227 {offsets = [0, 0], sizes = [2, 32], strides = [1, 1]} : vector<2x96xf32> to vector<2x32xf32>
    %229 = vector.extract_strided_slice %227 {offsets = [0, 32], sizes = [2, 32], strides = [1, 1]} : vector<2x96xf32> to vector<2x32xf32>
    %230 = vector.extract_strided_slice %227 {offsets = [0, 64], sizes = [2, 32], strides = [1, 1]} : vector<2x96xf32> to vector<2x32xf32>
    %231 = vector.extract_strided_slice %222 {offsets = [0, 96], sizes = [2, 32], strides = [1, 1]} : vector<2x128xf32> to vector<2x32xf32>
    %232 = arith.mulf %229, %216 : vector<2x32xf32>
    %233 = arith.mulf %228, %231 : vector<2x32xf32>
    %234 = arith.addf %232, %233 : vector<2x32xf32>
    %235 = math.tanh %234 : vector<2x32xf32>
    %236 = arith.mulf %230, %235 : vector<2x32xf32>
    %237 = vector.extract_strided_slice %110 {offsets = [0, 0], sizes = [2, 16], strides = [1, 1]} : vector<2x32xf32> to vector<2x16xf32>
    %238 = vector.extract_strided_slice %236 {offsets = [0, 16], sizes = [2, 16], strides = [1, 1]} : vector<2x32xf32> to vector<2x16xf32>
    %239 = tpu.concatenate %237, %238 in 1 : vector<2x16xf32>, vector<2x16xf32> -> vector<2x32xf32>
    %240 = vector.extract_strided_slice %128 {offsets = [0, 0], sizes = [2, 16], strides = [1, 1]} : vector<2x32xf32> to vector<2x16xf32>
    %241 = vector.extract_strided_slice %218 {offsets = [0, 16], sizes = [2, 16], strides = [1, 1]} : vector<2x32xf32> to vector<2x16xf32>
    %242 = tpu.concatenate %240, %241 in 1 : vector<2x16xf32>, vector<2x16xf32> -> vector<2x32xf32>
    %243 = vector.extract_strided_slice %146 {offsets = [0, 0], sizes = [2, 16], strides = [1, 1]} : vector<2x32xf32> to vector<2x16xf32>
    %244 = vector.extract_strided_slice %200 {offsets = [0, 16], sizes = [2, 16], strides = [1, 1]} : vector<2x32xf32> to vector<2x16xf32>
    %245 = tpu.concatenate %243, %244 in 1 : vector<2x16xf32>, vector<2x16xf32> -> vector<2x32xf32>
    %246 = vector.extract_strided_slice %164 {offsets = [0, 0], sizes = [2, 16], strides = [1, 1]} : vector<2x32xf32> to vector<2x16xf32>
    %247 = vector.extract_strided_slice %182 {offsets = [0, 16], sizes = [2, 16], strides = [1, 1]} : vector<2x32xf32> to vector<2x16xf32>
    %248 = tpu.concatenate %246, %247 in 1 : vector<2x16xf32>, vector<2x16xf32> -> vector<2x32xf32>
    %249 = vector.extract_strided_slice %182 {offsets = [0, 0], sizes = [2, 16], strides = [1, 1]} : vector<2x32xf32> to vector<2x16xf32>
    %250 = vector.extract_strided_slice %164 {offsets = [0, 16], sizes = [2, 16], strides = [1, 1]} : vector<2x32xf32> to vector<2x16xf32>
    %251 = tpu.concatenate %249, %250 in 1 : vector<2x16xf32>, vector<2x16xf32> -> vector<2x32xf32>
    %252 = vector.extract_strided_slice %200 {offsets = [0, 0], sizes = [2, 16], strides = [1, 1]} : vector<2x32xf32> to vector<2x16xf32>
    %253 = vector.extract_strided_slice %146 {offsets = [0, 16], sizes = [2, 16], strides = [1, 1]} : vector<2x32xf32> to vector<2x16xf32>
    %254 = tpu.concatenate %252, %253 in 1 : vector<2x16xf32>, vector<2x16xf32> -> vector<2x32xf32>
    %255 = vector.extract_strided_slice %218 {offsets = [0, 0], sizes = [2, 16], strides = [1, 1]} : vector<2x32xf32> to vector<2x16xf32>
    %256 = vector.extract_strided_slice %128 {offsets = [0, 16], sizes = [2, 16], strides = [1, 1]} : vector<2x32xf32> to vector<2x16xf32>
    %257 = tpu.concatenate %255, %256 in 1 : vector<2x16xf32>, vector<2x16xf32> -> vector<2x32xf32>
    %258 = vector.extract_strided_slice %236 {offsets = [0, 0], sizes = [2, 16], strides = [1, 1]} : vector<2x32xf32> to vector<2x16xf32>
    %259 = vector.extract_strided_slice %110 {offsets = [0, 16], sizes = [2, 16], strides = [1, 1]} : vector<2x32xf32> to vector<2x16xf32>
    %260 = tpu.concatenate %258, %259 in 1 : vector<2x16xf32>, vector<2x16xf32> -> vector<2x32xf32>
    %261 = tpu.concatenate %239, %242, %245, %248, %251, %254, %257, %260 in 0 : vector<2x32xf32>, vector<2x32xf32>, vector<2x32xf32>, vector<2x32xf32>, vector<2x32xf32>, vector<2x32xf32>, vector<2x32xf32>, vector<2x32xf32> -> vector<16x32xf32>
    %cst_59 = arith.constant dense<0.000000e+00> : vector<16x128xf32>
    %262 = tpu.matmul %261, %7, %cst_59 {dimension_numbers = #tpu.dot_dimension_numbers<[1], [0], [0], [1], [0, 0, 1, 1], [], []>} : vector<16x32xf32>, vector<32x128xf32>, vector<16x128xf32> -> vector<16x128xf32>
    %263 = vector.broadcast %8 : vector<1x128xf32> to vector<16x128xf32>
    %264 = arith.addf %262, %263 : vector<16x128xf32>
    %265 = vector.extract_strided_slice %264 {offsets = [0, 0], sizes = [2, 64], strides = [1, 1]} : vector<16x128xf32> to vector<2x64xf32>
    %266 = vector.extract_strided_slice %264 {offsets = [2, 0], sizes = [2, 64], strides = [1, 1]} : vector<16x128xf32> to vector<2x64xf32>
    %267 = vector.extract_strided_slice %264 {offsets = [4, 0], sizes = [2, 64], strides = [1, 1]} : vector<16x128xf32> to vector<2x64xf32>
    %268 = vector.extract_strided_slice %264 {offsets = [6, 0], sizes = [2, 64], strides = [1, 1]} : vector<16x128xf32> to vector<2x64xf32>
    %269 = vector.extract_strided_slice %264 {offsets = [8, 0], sizes = [2, 64], strides = [1, 1]} : vector<16x128xf32> to vector<2x64xf32>
    %270 = vector.extract_strided_slice %264 {offsets = [10, 0], sizes = [2, 64], strides = [1, 1]} : vector<16x128xf32> to vector<2x64xf32>
    %271 = vector.extract_strided_slice %264 {offsets = [12, 0], sizes = [2, 64], strides = [1, 1]} : vector<16x128xf32> to vector<2x64xf32>
    %272 = vector.extract_strided_slice %264 {offsets = [14, 0], sizes = [2, 64], strides = [1, 1]} : vector<16x128xf32> to vector<2x64xf32>
    %273 = math.tanh %265 : vector<2x64xf32>
    %274 = vector.extract_strided_slice %273 {offsets = [0, 0], sizes = [2, 48], strides = [1, 1]} : vector<2x64xf32> to vector<2x48xf32>
    %cst_60 = arith.constant 5.000000e-01 : f32
    %275 = vector.broadcast %cst_60 : f32 to vector<2x48xf32>
    %276 = arith.mulf %274, %275 : vector<2x48xf32>
    %cst_61 = arith.constant 5.000000e-01 : f32
    %277 = vector.broadcast %cst_61 : f32 to vector<2x48xf32>
    %278 = arith.addf %276, %277 : vector<2x48xf32>
    %279 = vector.extract_strided_slice %278 {offsets = [0, 0], sizes = [2, 16], strides = [1, 1]} : vector<2x48xf32> to vector<2x16xf32>
    %280 = vector.extract_strided_slice %278 {offsets = [0, 32], sizes = [2, 16], strides = [1, 1]} : vector<2x48xf32> to vector<2x16xf32>
    %281 = vector.extract_strided_slice %273 {offsets = [0, 48], sizes = [2, 16], strides = [1, 1]} : vector<2x64xf32> to vector<2x16xf32>
    %282 = arith.mulf %279, %281 : vector<2x16xf32>
    %283 = math.tanh %282 : vector<2x16xf32>
    %284 = arith.mulf %280, %283 : vector<2x16xf32>
    %285 = arith.truncf %284 : vector<2x16xf32> to vector<2x16xbf16>
    %cst_62 = arith.constant dense<0.000000e+00> : vector<2x64xf32>
    %286 = tpu.matmul %285, %6, %cst_62 {dimension_numbers = #tpu.dot_dimension_numbers<[1], [0], [0], [1], [0, 0, 1, 1], [], []>} : vector<2x16xbf16>, vector<16x64xbf16>, vector<2x64xf32> -> vector<2x64xf32>
    %287 = arith.addf %266, %286 : vector<2x64xf32>
    %288 = math.tanh %287 : vector<2x64xf32>
    %289 = vector.extract_strided_slice %288 {offsets = [0, 0], sizes = [2, 48], strides = [1, 1]} : vector<2x64xf32> to vector<2x48xf32>
    %cst_63 = arith.constant 5.000000e-01 : f32
    %290 = vector.broadcast %cst_63 : f32 to vector<2x48xf32>
    %291 = arith.mulf %289, %290 : vector<2x48xf32>
    %cst_64 = arith.constant 5.000000e-01 : f32
    %292 = vector.broadcast %cst_64 : f32 to vector<2x48xf32>
    %293 = arith.addf %291, %292 : vector<2x48xf32>
    %294 = vector.extract_strided_slice %293 {offsets = [0, 0], sizes = [2, 16], strides = [1, 1]} : vector<2x48xf32> to vector<2x16xf32>
    %295 = vector.extract_strided_slice %293 {offsets = [0, 16], sizes = [2, 16], strides = [1, 1]} : vector<2x48xf32> to vector<2x16xf32>
    %296 = vector.extract_strided_slice %293 {offsets = [0, 32], sizes = [2, 16], strides = [1, 1]} : vector<2x48xf32> to vector<2x16xf32>
    %297 = vector.extract_strided_slice %288 {offsets = [0, 48], sizes = [2, 16], strides = [1, 1]} : vector<2x64xf32> to vector<2x16xf32>
    %298 = arith.mulf %295, %282 : vector<2x16xf32>
    %299 = arith.mulf %294, %297 : vector<2x16xf32>
    %300 = arith.addf %298, %299 : vector<2x16xf32>
    %301 = math.tanh %300 : vector<2x16xf32>
    %302 = arith.mulf %296, %301 : vector<2x16xf32>
    %303 = arith.truncf %302 : vector<2x16xf32> to vector<2x16xbf16>
    %cst_65 = arith.constant dense<0.000000e+00> : vector<2x64xf32>
    %304 = tpu.matmul %303, %6, %cst_65 {dimension_numbers = #tpu.dot_dimension_numbers<[1], [0], [0], [1], [0, 0, 1, 1], [], []>} : vector<2x16xbf16>, vector<16x64xbf16>, vector<2x64xf32> -> vector<2x64xf32>
    %305 = arith.addf %267, %304 : vector<2x64xf32>
    %306 = math.tanh %305 : vector<2x64xf32>
    %307 = vector.extract_strided_slice %306 {offsets = [0, 0], sizes = [2, 48], strides = [1, 1]} : vector<2x64xf32> to vector<2x48xf32>
    %cst_66 = arith.constant 5.000000e-01 : f32
    %308 = vector.broadcast %cst_66 : f32 to vector<2x48xf32>
    %309 = arith.mulf %307, %308 : vector<2x48xf32>
    %cst_67 = arith.constant 5.000000e-01 : f32
    %310 = vector.broadcast %cst_67 : f32 to vector<2x48xf32>
    %311 = arith.addf %309, %310 : vector<2x48xf32>
    %312 = vector.extract_strided_slice %311 {offsets = [0, 0], sizes = [2, 16], strides = [1, 1]} : vector<2x48xf32> to vector<2x16xf32>
    %313 = vector.extract_strided_slice %311 {offsets = [0, 16], sizes = [2, 16], strides = [1, 1]} : vector<2x48xf32> to vector<2x16xf32>
    %314 = vector.extract_strided_slice %311 {offsets = [0, 32], sizes = [2, 16], strides = [1, 1]} : vector<2x48xf32> to vector<2x16xf32>
    %315 = vector.extract_strided_slice %306 {offsets = [0, 48], sizes = [2, 16], strides = [1, 1]} : vector<2x64xf32> to vector<2x16xf32>
    %316 = arith.mulf %313, %300 : vector<2x16xf32>
    %317 = arith.mulf %312, %315 : vector<2x16xf32>
    %318 = arith.addf %316, %317 : vector<2x16xf32>
    %319 = math.tanh %318 : vector<2x16xf32>
    %320 = arith.mulf %314, %319 : vector<2x16xf32>
    %321 = arith.truncf %320 : vector<2x16xf32> to vector<2x16xbf16>
    %cst_68 = arith.constant dense<0.000000e+00> : vector<2x64xf32>
    %322 = tpu.matmul %321, %6, %cst_68 {dimension_numbers = #tpu.dot_dimension_numbers<[1], [0], [0], [1], [0, 0, 1, 1], [], []>} : vector<2x16xbf16>, vector<16x64xbf16>, vector<2x64xf32> -> vector<2x64xf32>
    %323 = arith.addf %268, %322 : vector<2x64xf32>
    %324 = math.tanh %323 : vector<2x64xf32>
    %325 = vector.extract_strided_slice %324 {offsets = [0, 0], sizes = [2, 48], strides = [1, 1]} : vector<2x64xf32> to vector<2x48xf32>
    %cst_69 = arith.constant 5.000000e-01 : f32
    %326 = vector.broadcast %cst_69 : f32 to vector<2x48xf32>
    %327 = arith.mulf %325, %326 : vector<2x48xf32>
    %cst_70 = arith.constant 5.000000e-01 : f32
    %328 = vector.broadcast %cst_70 : f32 to vector<2x48xf32>
    %329 = arith.addf %327, %328 : vector<2x48xf32>
    %330 = vector.extract_strided_slice %329 {offsets = [0, 0], sizes = [2, 16], strides = [1, 1]} : vector<2x48xf32> to vector<2x16xf32>
    %331 = vector.extract_strided_slice %329 {offsets = [0, 16], sizes = [2, 16], strides = [1, 1]} : vector<2x48xf32> to vector<2x16xf32>
    %332 = vector.extract_strided_slice %329 {offsets = [0, 32], sizes = [2, 16], strides = [1, 1]} : vector<2x48xf32> to vector<2x16xf32>
    %333 = vector.extract_strided_slice %324 {offsets = [0, 48], sizes = [2, 16], strides = [1, 1]} : vector<2x64xf32> to vector<2x16xf32>
    %334 = arith.mulf %331, %318 : vector<2x16xf32>
    %335 = arith.mulf %330, %333 : vector<2x16xf32>
    %336 = arith.addf %334, %335 : vector<2x16xf32>
    %337 = math.tanh %336 : vector<2x16xf32>
    %338 = arith.mulf %332, %337 : vector<2x16xf32>
    %339 = arith.truncf %338 : vector<2x16xf32> to vector<2x16xbf16>
    %cst_71 = arith.constant dense<0.000000e+00> : vector<2x64xf32>
    %340 = tpu.matmul %339, %6, %cst_71 {dimension_numbers = #tpu.dot_dimension_numbers<[1], [0], [0], [1], [0, 0, 1, 1], [], []>} : vector<2x16xbf16>, vector<16x64xbf16>, vector<2x64xf32> -> vector<2x64xf32>
    %341 = arith.addf %269, %340 : vector<2x64xf32>
    %342 = math.tanh %341 : vector<2x64xf32>
    %343 = vector.extract_strided_slice %342 {offsets = [0, 0], sizes = [2, 48], strides = [1, 1]} : vector<2x64xf32> to vector<2x48xf32>
    %cst_72 = arith.constant 5.000000e-01 : f32
    %344 = vector.broadcast %cst_72 : f32 to vector<2x48xf32>
    %345 = arith.mulf %343, %344 : vector<2x48xf32>
    %cst_73 = arith.constant 5.000000e-01 : f32
    %346 = vector.broadcast %cst_73 : f32 to vector<2x48xf32>
    %347 = arith.addf %345, %346 : vector<2x48xf32>
    %348 = vector.extract_strided_slice %347 {offsets = [0, 0], sizes = [2, 16], strides = [1, 1]} : vector<2x48xf32> to vector<2x16xf32>
    %349 = vector.extract_strided_slice %347 {offsets = [0, 16], sizes = [2, 16], strides = [1, 1]} : vector<2x48xf32> to vector<2x16xf32>
    %350 = vector.extract_strided_slice %347 {offsets = [0, 32], sizes = [2, 16], strides = [1, 1]} : vector<2x48xf32> to vector<2x16xf32>
    %351 = vector.extract_strided_slice %342 {offsets = [0, 48], sizes = [2, 16], strides = [1, 1]} : vector<2x64xf32> to vector<2x16xf32>
    %352 = arith.mulf %349, %336 : vector<2x16xf32>
    %353 = arith.mulf %348, %351 : vector<2x16xf32>
    %354 = arith.addf %352, %353 : vector<2x16xf32>
    %355 = math.tanh %354 : vector<2x16xf32>
    %356 = arith.mulf %350, %355 : vector<2x16xf32>
    %357 = arith.truncf %356 : vector<2x16xf32> to vector<2x16xbf16>
    %cst_74 = arith.constant dense<0.000000e+00> : vector<2x64xf32>
    %358 = tpu.matmul %357, %6, %cst_74 {dimension_numbers = #tpu.dot_dimension_numbers<[1], [0], [0], [1], [0, 0, 1, 1], [], []>} : vector<2x16xbf16>, vector<16x64xbf16>, vector<2x64xf32> -> vector<2x64xf32>
    %359 = arith.addf %270, %358 : vector<2x64xf32>
    %360 = math.tanh %359 : vector<2x64xf32>
    %361 = vector.extract_strided_slice %360 {offsets = [0, 0], sizes = [2, 48], strides = [1, 1]} : vector<2x64xf32> to vector<2x48xf32>
    %cst_75 = arith.constant 5.000000e-01 : f32
    %362 = vector.broadcast %cst_75 : f32 to vector<2x48xf32>
    %363 = arith.mulf %361, %362 : vector<2x48xf32>
    %cst_76 = arith.constant 5.000000e-01 : f32
    %364 = vector.broadcast %cst_76 : f32 to vector<2x48xf32>
    %365 = arith.addf %363, %364 : vector<2x48xf32>
    %366 = vector.extract_strided_slice %365 {offsets = [0, 0], sizes = [2, 16], strides = [1, 1]} : vector<2x48xf32> to vector<2x16xf32>
    %367 = vector.extract_strided_slice %365 {offsets = [0, 16], sizes = [2, 16], strides = [1, 1]} : vector<2x48xf32> to vector<2x16xf32>
    %368 = vector.extract_strided_slice %365 {offsets = [0, 32], sizes = [2, 16], strides = [1, 1]} : vector<2x48xf32> to vector<2x16xf32>
    %369 = vector.extract_strided_slice %360 {offsets = [0, 48], sizes = [2, 16], strides = [1, 1]} : vector<2x64xf32> to vector<2x16xf32>
    %370 = arith.mulf %367, %354 : vector<2x16xf32>
    %371 = arith.mulf %366, %369 : vector<2x16xf32>
    %372 = arith.addf %370, %371 : vector<2x16xf32>
    %373 = math.tanh %372 : vector<2x16xf32>
    %374 = arith.mulf %368, %373 : vector<2x16xf32>
    %375 = arith.truncf %374 : vector<2x16xf32> to vector<2x16xbf16>
    %cst_77 = arith.constant dense<0.000000e+00> : vector<2x64xf32>
    %376 = tpu.matmul %375, %6, %cst_77 {dimension_numbers = #tpu.dot_dimension_numbers<[1], [0], [0], [1], [0, 0, 1, 1], [], []>} : vector<2x16xbf16>, vector<16x64xbf16>, vector<2x64xf32> -> vector<2x64xf32>
    %377 = arith.addf %271, %376 : vector<2x64xf32>
    %378 = math.tanh %377 : vector<2x64xf32>
    %379 = vector.extract_strided_slice %378 {offsets = [0, 0], sizes = [2, 48], strides = [1, 1]} : vector<2x64xf32> to vector<2x48xf32>
    %cst_78 = arith.constant 5.000000e-01 : f32
    %380 = vector.broadcast %cst_78 : f32 to vector<2x48xf32>
    %381 = arith.mulf %379, %380 : vector<2x48xf32>
    %cst_79 = arith.constant 5.000000e-01 : f32
    %382 = vector.broadcast %cst_79 : f32 to vector<2x48xf32>
    %383 = arith.addf %381, %382 : vector<2x48xf32>
    %384 = vector.extract_strided_slice %383 {offsets = [0, 0], sizes = [2, 16], strides = [1, 1]} : vector<2x48xf32> to vector<2x16xf32>
    %385 = vector.extract_strided_slice %383 {offsets = [0, 16], sizes = [2, 16], strides = [1, 1]} : vector<2x48xf32> to vector<2x16xf32>
    %386 = vector.extract_strided_slice %383 {offsets = [0, 32], sizes = [2, 16], strides = [1, 1]} : vector<2x48xf32> to vector<2x16xf32>
    %387 = vector.extract_strided_slice %378 {offsets = [0, 48], sizes = [2, 16], strides = [1, 1]} : vector<2x64xf32> to vector<2x16xf32>
    %388 = arith.mulf %385, %372 : vector<2x16xf32>
    %389 = arith.mulf %384, %387 : vector<2x16xf32>
    %390 = arith.addf %388, %389 : vector<2x16xf32>
    %391 = math.tanh %390 : vector<2x16xf32>
    %392 = arith.mulf %386, %391 : vector<2x16xf32>
    %393 = arith.truncf %392 : vector<2x16xf32> to vector<2x16xbf16>
    %cst_80 = arith.constant dense<0.000000e+00> : vector<2x64xf32>
    %394 = tpu.matmul %393, %6, %cst_80 {dimension_numbers = #tpu.dot_dimension_numbers<[1], [0], [0], [1], [0, 0, 1, 1], [], []>} : vector<2x16xbf16>, vector<16x64xbf16>, vector<2x64xf32> -> vector<2x64xf32>
    %395 = arith.addf %272, %394 : vector<2x64xf32>
    %396 = math.tanh %395 : vector<2x64xf32>
    %397 = vector.extract_strided_slice %396 {offsets = [0, 0], sizes = [2, 48], strides = [1, 1]} : vector<2x64xf32> to vector<2x48xf32>
    %cst_81 = arith.constant 5.000000e-01 : f32
    %398 = vector.broadcast %cst_81 : f32 to vector<2x48xf32>
    %399 = arith.mulf %397, %398 : vector<2x48xf32>
    %cst_82 = arith.constant 5.000000e-01 : f32
    %400 = vector.broadcast %cst_82 : f32 to vector<2x48xf32>
    %401 = arith.addf %399, %400 : vector<2x48xf32>
    %402 = vector.extract_strided_slice %401 {offsets = [0, 0], sizes = [2, 16], strides = [1, 1]} : vector<2x48xf32> to vector<2x16xf32>
    %403 = vector.extract_strided_slice %401 {offsets = [0, 16], sizes = [2, 16], strides = [1, 1]} : vector<2x48xf32> to vector<2x16xf32>
    %404 = vector.extract_strided_slice %401 {offsets = [0, 32], sizes = [2, 16], strides = [1, 1]} : vector<2x48xf32> to vector<2x16xf32>
    %405 = vector.extract_strided_slice %396 {offsets = [0, 48], sizes = [2, 16], strides = [1, 1]} : vector<2x64xf32> to vector<2x16xf32>
    %406 = arith.mulf %403, %390 : vector<2x16xf32>
    %407 = arith.mulf %402, %405 : vector<2x16xf32>
    %408 = arith.addf %406, %407 : vector<2x16xf32>
    %409 = math.tanh %408 : vector<2x16xf32>
    %410 = arith.mulf %404, %409 : vector<2x16xf32>
    %411 = vector.extract_strided_slice %264 {offsets = [14, 64], sizes = [2, 64], strides = [1, 1]} : vector<16x128xf32> to vector<2x64xf32>
    %412 = math.tanh %411 : vector<2x64xf32>
    %413 = vector.extract_strided_slice %412 {offsets = [0, 0], sizes = [2, 16], strides = [1, 1]} : vector<2x64xf32> to vector<2x16xf32>
    %cst_83 = arith.constant 5.000000e-01 : f32
    %414 = vector.broadcast %cst_83 : f32 to vector<2x16xf32>
    %415 = arith.mulf %413, %414 : vector<2x16xf32>
    %cst_84 = arith.constant 5.000000e-01 : f32
    %416 = vector.broadcast %cst_84 : f32 to vector<2x16xf32>
    %417 = arith.addf %415, %416 : vector<2x16xf32>
    %418 = vector.extract_strided_slice %412 {offsets = [0, 32], sizes = [2, 16], strides = [1, 1]} : vector<2x64xf32> to vector<2x16xf32>
    %cst_85 = arith.constant 5.000000e-01 : f32
    %419 = vector.broadcast %cst_85 : f32 to vector<2x16xf32>
    %420 = arith.mulf %418, %419 : vector<2x16xf32>
    %cst_86 = arith.constant 5.000000e-01 : f32
    %421 = vector.broadcast %cst_86 : f32 to vector<2x16xf32>
    %422 = arith.addf %420, %421 : vector<2x16xf32>
    %423 = vector.extract_strided_slice %412 {offsets = [0, 48], sizes = [2, 16], strides = [1, 1]} : vector<2x64xf32> to vector<2x16xf32>
    %424 = arith.mulf %417, %423 : vector<2x16xf32>
    %425 = math.tanh %424 : vector<2x16xf32>
    %426 = arith.mulf %422, %425 : vector<2x16xf32>
    %427 = tpu.concatenate %410, %426 in 1 : vector<2x16xf32>, vector<2x16xf32> -> vector<2x32xf32>
    %cst_87 = arith.constant dense<0.000000e+00> : vector<2x128xf32>
    %428 = tpu.matmul %427, %9, %cst_87 {dimension_numbers = #tpu.dot_dimension_numbers<[1], [0], [0], [1], [0, 0, 1, 1], [], []>} : vector<2x32xf32>, vector<32x128xf32>, vector<2x128xf32> -> vector<2x128xf32>
    %429 = vector.broadcast %10 : vector<1x128xf32> to vector<2x128xf32>
    %430 = arith.addf %428, %429 : vector<2x128xf32>
    %c0_88 = arith.constant 0 : index
    %c0_89 = arith.constant 0 : index
    %431 = vector.load %arg2[%c0_88, %c0_89] : memref<2x128xf32, #tpu.memory_space<vmem>>, vector<2x128xf32>
    tpu.vector_store %arg2[%c0_88, %c0_89], %430 {strides = array<i32>} : memref<2x128xf32, #tpu.memory_space<vmem>>, vector<2x128xf32>,
    return
  }
}

</mosaic_0001>

<llo_original>
// kernel: rnn_forward.1
$region0: #{rnn_forward.1}
  #allocation0 [shape = 'u32[]', space=smem, size = 0x4, offset = 0x4, fixed_abs, tag = 'smem constant byte address 0x4 - core index']
  #allocation1 [shape = 'u32[144,128]{1,0:T(1,128)}', space=vmem, size = 0x12000, scoped, tag = 'internal scratch']
  %s0 = inlined_call_operand.vmem [shape: f32[2,8], index: 0, kind: input, shape index: {}]
  %s1 = inlined_call_operand.hbm [shape: f32[120,128], index: 1, kind: input, shape index: {}]
  %s2 = inlined_call_operand.hbm [shape: f32[2,128], index: 2, kind: output, shape index: {}]
  %s3 = sld [smem:[#allocation0]]
  $region22: #{rnn_forward.1} parent=0
    _
  %s5 = ssub.s32 1, %s3
  %s6 = scalar_select 0, %s5, %s3
  $region1: #{rnn_forward.1} parent=0
    #allocation2 [shape = 'u8[61440]{0}', space=vmem, size = 0xf000, scoped, tag = 'input window, operand 1, single buffered']
    #allocation3 [shape = 's32[1]{0}', space=sflag, size = 0x4, scoped, tag = 'scoped memory for rnn_forward.1']
    #allocation4 [shape = 's32[1]{0}', space=sflag, size = 0x4, scoped, tag = 'scoped memory for rnn_forward.1']
    #allocation5 [shape = 'u8[1024]{0}', space=vmem, size = 0x400, scoped, tag = 'output window, operand 0, single buffered']
    %7 = vsyncpa [#allocation3], 0
    %8 = vsyncpa [#allocation4], 0
    // Predicated region
    $region2: #{rnn_forward.1} parent=1 // pred_check
      _
    $region3: #{rnn_forward.1} parent=1 // pred_check_branch
      %10 = sbr.rel (0) target = $region5
    $region4: #{rnn_forward.1} parent=1 // pred_region
      _
    $region5: #{rnn_forward.1} parent=1 // pred_fallthru
      _
    // Predicated region
    $region6: #{rnn_forward.1} parent=1 // pred_check
      _
    $region7: #{rnn_forward.1} parent=1 // pred_check_branch
      %12 = sbr.rel (0) target = $region9
    $region8: #{rnn_forward.1} parent=1 // pred_region
      %s14 = ssub.s32 1920, 1920
      %15 = vsyncadd [#allocation3], %s14
      %s16 = sshll.u32 [#allocation2], 4
      %s17 = int_to_ptr.vmem [resolvable:$true] %s16
      %22 = dma.hbm_to_vmem [thread:$0]  %s1, 1920, %s17, [#allocation3], 128, 128, 8
    $region9: #{rnn_forward.1} parent=1 // pred_fallthru
      _
    // Predicated region
    $region10: #{rnn_forward.1} parent=1 // pred_check
      _
    $region11: #{rnn_forward.1} parent=1 // pred_check_branch
      %24 = sbr.rel (0) target = $region13
    $region12: #{rnn_forward.1} parent=1 // pred_region
      %25 = dma.done [#allocation3], 1920
    $region13: #{rnn_forward.1} parent=1 // pred_fallthru
      _
    %v27 = vld [vmem:[#allocation2] sm:$0x1]
    %v28 = vld [vmem:[#allocation2 + $0x1] sm:$0x1]
    %v29 = vld [vmem:[#allocation2 + $0x2] sm:$0x1]
    %v30 = vld [vmem:[#allocation2 + $0x3] sm:$0xff]
    %v31 = vld [vmem:[#allocation2 + $0xb] sm:$0xff]
    %v32 = vld [vmem:[#allocation2 + $0x13] sm:$0xff]
    %v33 = vld [vmem:[#allocation2 + $0x1b] sm:$0xff]
    %v34 = vpack.c.bf16 %v31, %v30
    %v35 = vpack.c.bf16 %v33, %v32
    %v36 = vld [vmem:[#allocation2 + $0x43] sm:$0xff]
    %v37 = vld [vmem:[#allocation2 + $0x4b] sm:$0xff]
    %v38 = vpack.c.bf16 %v37, %v36
    %v39 = vld [vmem:[#allocation2 + $0x23] sm:$0xff]
    %v40 = vld [vmem:[#allocation2 + $0x2b] sm:$0xff]
    %v41 = vld [vmem:[#allocation2 + $0x33] sm:$0xff]
    %v42 = vld [vmem:[#allocation2 + $0x3b] sm:$0xff]
    %v43 = vld [vmem:[#allocation2 + $0x53] sm:$0x1]
    %v44 = vld [vmem:[#allocation2 + $0x54] sm:$0xff]
    %v45 = vld [vmem:[#allocation2 + $0x5c] sm:$0xff]
    %v46 = vld [vmem:[#allocation2 + $0x64] sm:$0xff]
    %v47 = vld [vmem:[#allocation2 + $0x6c] sm:$0xff]
    %v48 = vld [vmem:[#allocation2 + $0x74] sm:$0x1]
    %v49 = vld [vmem:[%s0] sm:$0x3]
    %51 = vset.pattern.permute.xlu0 0
    %52 = vperm.xlu0 %51, %v49
    %v53 = vpop.permute.xlu0 %52
    %v55 = vlaneseq
    %v56 = vshrl.u32 %v55, 7
    %v57 = vsub.s32 0, %v56
    %v58 = vrot.slane %v27, %v57
    %v59 = vmul.f32 %v53, %v58
    %60 = vset.pattern.permute.xlu0 7
    %61 = vperm.xlu0 %60, %v49
    %v62 = vpop.permute.xlu0 %61
    %v64 = vlaneseq
    %v65 = vshrl.u32 %v64, 7
    %v66 = vsub.s32 0, %v65
    %v67 = vrot.slane %v28, %v66
    %v68 = vmul.f32 %v62, %v67
    %v69 = vadd.f32 %v59, %v68
    %v70 = vlaneseq
    %v71 = vshrl.u32 %v70, 7
    %v72 = vsub.s32 0, %v71
    %v73 = vrot.slane %v29, %v72
    %v74 = vadd.f32 %v69, %v73
    %75 = vset.pattern.permute.xlu0 1
    %76 = vperm.xlu0 %75, %v49
    %v77 = vpop.permute.xlu0 %76
    %v79 = vmul.f32 %v77, %v58
    %80 = vset.pattern.permute.xlu0 6
    %81 = vperm.xlu0 %80, %v49
    %v82 = vpop.permute.xlu0 %81
    %v84 = vmul.f32 %v82, %v67
    %v85 = vadd.f32 %v79, %v84
    %v86 = vadd.f32 %v85, %v73
    %87 = vset.pattern.permute.xlu0 2
    %88 = vperm.xlu0 %87, %v49
    %v89 = vpop.permute.xlu0 %88
    %v91 = vmul.f32 %v89, %v58
    %92 = vset.pattern.permute.xlu0 5
    %93 = vperm.xlu0 %92, %v49
    %v94 = vpop.permute.xlu0 %93
    %v96 = vmul.f32 %v94, %v67
    %v97 = vadd.f32 %v91, %v96
    %v98 = vadd.f32 %v97, %v73
    %99 = vset.pattern.permute.xlu0 3
    %100 = vperm.xlu0 %99, %v49
    %v101 = vpop.permute.xlu0 %100
    %v103 = vmul.f32 %v101, %v58
    %104 = vset.pattern.permute.xlu0 4
    %105 = vperm.xlu0 %104, %v49
    %v106 = vpop.permute.xlu0 %105
    %v108 = vmul.f32 %v106, %v67
    %v109 = vadd.f32 %v103, %v108
    %v110 = vadd.f32 %v109, %v73
    %v111 = vmul.f32 %v106, %v58
    %v112 = vmul.f32 %v101, %v67
    %v113 = vadd.f32 %v111, %v112
    %v114 = vadd.f32 %v113, %v73
    %v115 = vmul.f32 %v94, %v58
    %v116 = vmul.f32 %v89, %v67
    %v117 = vadd.f32 %v115, %v116
    %v118 = vadd.f32 %v117, %v73
    %v119 = vmul.f32 %v82, %v58
    %v120 = vmul.f32 %v77, %v67
    %v121 = vadd.f32 %v119, %v120
    %v122 = vadd.f32 %v121, %v73
    %v123 = vmul.f32 %v62, %v58
    %v124 = vmul.f32 %v53, %v67
    %v125 = vadd.f32 %v123, %v124
    %v126 = vadd.f32 %v125, %v73
    %v127 = vtanh.pop %v74
    %v128 = vmul.f32 %v127, 0.5
    %v129 = vadd.f32 %v128, 0.5
    %131 = vrot.lane.b32.xlu0 %v127, 32
    %v132 = vpop.permute.xlu0 %131
    %v134 = vmul.f32 %v129, %v132
    %v135 = vtanh.pop %v134
    %137 = vrot.lane.b32.xlu0 %v135, 64
    %v138 = vpop.permute.xlu0 %137
    %v140 = vmul.f32 %v129, %v138
    %v141 = vpack.c.bf16 %v140, %v140
    %143 = vrot.lane.b32.xlu0 %v141, 64
    %v144 = vpop.permute.xlu0 %143
    %vm145 = vcmask 261120
    %v147 = vsel %vm145, %v144, 0
    %149 = vmatprep.subr.bf16.mxu0 0
    %150 = vmatpush1.bf16.msra.mxu0 %v34
    %151 = vmatprep.subr.bf16.mxu0 0
    %152 = vmatpush1.bf16.msra.mxu0 %v35
    %153 = vmatprep.subr.bf16.mxu0 0
    %154 = vmatpush1.bf16.msra.mxu0 0
    %155 = vmatprep.subr.bf16.mxu0 0
    %156 = vmatpush1.bf16.msra.mxu0 0
    %157 = vmatprep.subr.bf16.mxu0 0
    %158 = vmatpush1.bf16.msra.mxu0 0
    %159 = vmatprep.subr.bf16.mxu0 0
    %160 = vmatpush1.bf16.msra.mxu0 0
    %161 = vmatprep.subr.bf16.mxu0 0
    %162 = vmatpush1.bf16.msra.mxu0 0
    %163 = vmatprep.subr.bf16.mxu0 0
    %164 = vmatpush1.bf16.msra.mxu0 0
    %165 = vmatprep.subr.bf16.mxu0 0
    %166 = vmatpush1.bf16.msra.mxu0 0
    %167 = vmatprep.subr.bf16.mxu0 0
    %168 = vmatpush1.bf16.msra.mxu0 0
    %169 = vmatprep.subr.bf16.mxu0 0
    %170 = vmatpush1.bf16.msra.mxu0 0
    %171 = vmatprep.subr.bf16.mxu0 0
    %172 = vmatpush1.bf16.msra.mxu0 0
    %173 = vmatprep.subr.bf16.mxu0 0
    %174 = vmatpush1.bf16.msra.mxu0 0
    %175 = vmatprep.subr.bf16.mxu0 0
    %176 = vmatpush1.bf16.msra.mxu0 0
    %177 = vmatprep.subr.bf16.mxu0 0
    %178 = vmatpush1.bf16.msra.mxu0 0
    %179 = vmatprep.subr.bf16.mxu0 0
    %180 = vmatpush1.bf16.msra.mxu0 0
    %181 = vmatprep.mubr.bf16.mxu0 0
    %182 = vmatmul.mubr.bf16.gmra.mrb[0].mxu0 %v147
    %v183 = vpop.f32.mrb[0].mxu0
    %v184 = vadd.f32 0.0, %v183
    %v185 = vpop.f32.mrb[0].mxu0
    %v186 = vpop.f32.mrb[0].mxu0
    %v187 = vpop.f32.mrb[0].mxu0
    %188 = vdwg.mxu0
    %v189 = vadd.f32 %v86, %v184
    %v190 = vtanh.pop %v189
    %v191 = vmul.f32 %v190, 0.5
    %v192 = vadd.f32 %v191, 0.5
    %194 = vrot.lane.b32.xlu0 %v134, 32
    %v195 = vpop.permute.xlu0 %194
    %v197 = vmul.f32 %v192, %v195
    %199 = vrot.lane.b32.xlu0 %v190, 32
    %v200 = vpop.permute.xlu0 %199
    %v202 = vmul.f32 %v192, %v200
    %204 = vrot.lane.b32.xlu0 %v202, 32
    %v205 = vpop.permute.xlu0 %204
    %v207 = vadd.f32 %v197, %v205
    %v208 = vtanh.pop %v207
    %210 = vrot.lane.b32.xlu0 %v208, 32
    %v211 = vpop.permute.xlu0 %210
    %v213 = vmul.f32 %v192, %v211
    %v214 = vpack.c.bf16 %v213, %v213
    %216 = vrot.lane.b32.xlu0 %v214, 64
    %v217 = vpop.permute.xlu0 %216
    %v219 = vsel %vm145, %v217, 0
    %221 = vmatprep.subr.bf16.mxu0 0
    %222 = vmatpush1.bf16.msra.mxu0 %v34
    %223 = vmatprep.subr.bf16.mxu0 0
    %224 = vmatpush1.bf16.msra.mxu0 %v35
    %225 = vmatprep.subr.bf16.mxu0 0
    %226 = vmatpush1.bf16.msra.mxu0 0
    %227 = vmatprep.subr.bf16.mxu0 0
    %228 = vmatpush1.bf16.msra.mxu0 0
    %229 = vmatprep.subr.bf16.mxu0 0
    %230 = vmatpush1.bf16.msra.mxu0 0
    %231 = vmatprep.subr.bf16.mxu0 0
    %232 = vmatpush1.bf16.msra.mxu0 0
    %233 = vmatprep.subr.bf16.mxu0 0
    %234 = vmatpush1.bf16.msra.mxu0 0
    %235 = vmatprep.subr.bf16.mxu0 0
    %236 = vmatpush1.bf16.msra.mxu0 0
    %237 = vmatprep.subr.bf16.mxu0 0
    %238 = vmatpush1.bf16.msra.mxu0 0
    %239 = vmatprep.subr.bf16.mxu0 0
    %240 = vmatpush1.bf16.msra.mxu0 0
    %241 = vmatprep.subr.bf16.mxu0 0
    %242 = vmatpush1.bf16.msra.mxu0 0
    %243 = vmatprep.subr.bf16.mxu0 0
    %244 = vmatpush1.bf16.msra.mxu0 0
    %245 = vmatprep.subr.bf16.mxu0 0
    %246 = vmatpush1.bf16.msra.mxu0 0
    %247 = vmatprep.subr.bf16.mxu0 0
    %248 = vmatpush1.bf16.msra.mxu0 0
    %249 = vmatprep.subr.bf16.mxu0 0
    %250 = vmatpush1.bf16.msra.mxu0 0
    %251 = vmatprep.subr.bf16.mxu0 0
    %252 = vmatpush1.bf16.msra.mxu0 0
    %253 = vmatprep.mubr.bf16.mxu0 0
    %254 = vmatmul.mubr.bf16.gmra.mrb[0].mxu0 %v219
    %v255 = vpop.f32.mrb[0].mxu0
    %v256 = vadd.f32 0.0, %v255
    %v257 = vpop.f32.mrb[0].mxu0
    %v258 = vpop.f32.mrb[0].mxu0
    %v259 = vpop.f32.mrb[0].mxu0
    %260 = vdwg.mxu0
    %v261 = vadd.f32 %v98, %v256
    %v262 = vtanh.pop %v261
    %v263 = vmul.f32 %v262, 0.5
    %v264 = vadd.f32 %v263, 0.5
    %v265 = vmul.f32 %v264, %v207
    %267 = vrot.lane.b32.xlu0 %v262, 32
    %v268 = vpop.permute.xlu0 %267
    %v270 = vmul.f32 %v264, %v268
    %272 = vrot.lane.b32.xlu0 %v270, 32
    %v273 = vpop.permute.xlu0 %272
    %v275 = vadd.f32 %v265, %v273
    %v276 = vtanh.pop %v275
    %278 = vrot.lane.b32.xlu0 %v276, 32
    %v279 = vpop.permute.xlu0 %278
    %v281 = vmul.f32 %v264, %v279
    %v282 = vpack.c.bf16 %v281, %v281
    %284 = vrot.lane.b32.xlu0 %v282, 64
    %v285 = vpop.permute.xlu0 %284
    %v287 = vsel %vm145, %v285, 0
    %289 = vmatprep.subr.bf16.mxu0 0
    %290 = vmatpush1.bf16.msra.mxu0 %v34
    %291 = vmatprep.subr.bf16.mxu0 0
    %292 = vmatpush1.bf16.msra.mxu0 %v35
    %293 = vmatprep.subr.bf16.mxu0 0
    %294 = vmatpush1.bf16.msra.mxu0 0
    %295 = vmatprep.subr.bf16.mxu0 0
    %296 = vmatpush1.bf16.msra.mxu0 0
    %297 = vmatprep.subr.bf16.mxu0 0
    %298 = vmatpush1.bf16.msra.mxu0 0
    %299 = vmatprep.subr.bf16.mxu0 0
    %300 = vmatpush1.bf16.msra.mxu0 0
    %301 = vmatprep.subr.bf16.mxu0 0
    %302 = vmatpush1.bf16.msra.mxu0 0
    %303 = vmatprep.subr.bf16.mxu0 0
    %304 = vmatpush1.bf16.msra.mxu0 0
    %305 = vmatprep.subr.bf16.mxu0 0
    %306 = vmatpush1.bf16.msra.mxu0 0
    %307 = vmatprep.subr.bf16.mxu0 0
    %308 = vmatpush1.bf16.msra.mxu0 0
    %309 = vmatprep.subr.bf16.mxu0 0
    %310 = vmatpush1.bf16.msra.mxu0 0
    %311 = vmatprep.subr.bf16.mxu0 0
    %312 = vmatpush1.bf16.msra.mxu0 0
    %313 = vmatprep.subr.bf16.mxu0 0
    %314 = vmatpush1.bf16.msra.mxu0 0
    %315 = vmatprep.subr.bf16.mxu0 0
    %316 = vmatpush1.bf16.msra.mxu0 0
    %317 = vmatprep.subr.bf16.mxu0 0
    %318 = vmatpush1.bf16.msra.mxu0 0
    %319 = vmatprep.subr.bf16.mxu0 0
    %320 = vmatpush1.bf16.msra.mxu0 0
    %321 = vmatprep.mubr.bf16.mxu0 0
    %322 = vmatmul.mubr.bf16.gmra.mrb[0].mxu0 %v287
    %v323 = vpop.f32.mrb[0].mxu0
    %v324 = vadd.f32 0.0, %v323
    %v325 = vpop.f32.mrb[0].mxu0
    %v326 = vpop.f32.mrb[0].mxu0
    %v327 = vpop.f32.mrb[0].mxu0
    %328 = vdwg.mxu0
    %v329 = vadd.f32 %v110, %v324
    %v330 = vtanh.pop %v329
    %v331 = vmul.f32 %v330, 0.5
    %v332 = vadd.f32 %v331, 0.5
    %v333 = vmul.f32 %v332, %v275
    %335 = vrot.lane.b32.xlu0 %v330, 32
    %v336 = vpop.permute.xlu0 %335
    %v338 = vmul.f32 %v332, %v336
    %340 = vrot.lane.b32.xlu0 %v338, 32
    %v341 = vpop.permute.xlu0 %340
    %v343 = vadd.f32 %v333, %v341
    %v344 = vtanh.pop %v343
    %346 = vrot.lane.b32.xlu0 %v344, 32
    %v347 = vpop.permute.xlu0 %346
    %v349 = vmul.f32 %v332, %v347
    %v350 = vpack.c.bf16 %v349, %v349
    %352 = vrot.lane.b32.xlu0 %v350, 64
    %v353 = vpop.permute.xlu0 %352
    %v355 = vsel %vm145, %v353, 0
    %357 = vmatprep.subr.bf16.mxu0 0
    %358 = vmatpush1.bf16.msra.mxu0 %v34
    %359 = vmatprep.subr.bf16.mxu0 0
    %360 = vmatpush1.bf16.msra.mxu0 %v35
    %361 = vmatprep.subr.bf16.mxu0 0
    %362 = vmatpush1.bf16.msra.mxu0 0
    %363 = vmatprep.subr.bf16.mxu0 0
    %364 = vmatpush1.bf16.msra.mxu0 0
    %365 = vmatprep.subr.bf16.mxu0 0
    %366 = vmatpush1.bf16.msra.mxu0 0
    %367 = vmatprep.subr.bf16.mxu0 0
    %368 = vmatpush1.bf16.msra.mxu0 0
    %369 = vmatprep.subr.bf16.mxu0 0
    %370 = vmatpush1.bf16.msra.mxu0 0
    %371 = vmatprep.subr.bf16.mxu0 0
    %372 = vmatpush1.bf16.msra.mxu0 0
    %373 = vmatprep.subr.bf16.mxu0 0
    %374 = vmatpush1.bf16.msra.mxu0 0
    %375 = vmatprep.subr.bf16.mxu0 0
    %376 = vmatpush1.bf16.msra.mxu0 0
    %377 = vmatprep.subr.bf16.mxu0 0
    %378 = vmatpush1.bf16.msra.mxu0 0
    %379 = vmatprep.subr.bf16.mxu0 0
    %380 = vmatpush1.bf16.msra.mxu0 0
    %381 = vmatprep.subr.bf16.mxu0 0
    %382 = vmatpush1.bf16.msra.mxu0 0
    %383 = vmatprep.subr.bf16.mxu0 0
    %384 = vmatpush1.bf16.msra.mxu0 0
    %385 = vmatprep.subr.bf16.mxu0 0
    %386 = vmatpush1.bf16.msra.mxu0 0
    %387 = vmatprep.subr.bf16.mxu0 0
    %388 = vmatpush1.bf16.msra.mxu0 0
    %389 = vmatprep.mubr.bf16.mxu0 0
    %390 = vmatmul.mubr.bf16.gmra.mrb[0].mxu0 %v355
    %v391 = vpop.f32.mrb[0].mxu0
    %v392 = vadd.f32 0.0, %v391
    %v393 = vpop.f32.mrb[0].mxu0
    %v394 = vpop.f32.mrb[0].mxu0
    %v395 = vpop.f32.mrb[0].mxu0
    %396 = vdwg.mxu0
    %v397 = vadd.f32 %v114, %v392
    %v398 = vtanh.pop %v397
    %v399 = vmul.f32 %v398, 0.5
    %v400 = vadd.f32 %v399, 0.5
    %v401 = vmul.f32 %v400, %v343
    %403 = vrot.lane.b32.xlu0 %v398, 32
    %v404 = vpop.permute.xlu0 %403
    %v406 = vmul.f32 %v400, %v404
    %408 = vrot.lane.b32.xlu0 %v406, 32
    %v409 = vpop.permute.xlu0 %408
    %v411 = vadd.f32 %v401, %v409
    %v412 = vtanh.pop %v411
    %414 = vrot.lane.b32.xlu0 %v412, 32
    %v415 = vpop.permute.xlu0 %414
    %v417 = vmul.f32 %v400, %v415
    %v418 = vpack.c.bf16 %v417, %v417
    %420 = vrot.lane.b32.xlu0 %v418, 64
    %v421 = vpop.permute.xlu0 %420
    %v423 = vsel %vm145, %v421, 0
    %425 = vmatprep.subr.bf16.mxu0 0
    %426 = vmatpush1.bf16.msra.mxu0 %v34
    %427 = vmatprep.subr.bf16.mxu0 0
    %428 = vmatpush1.bf16.msra.mxu0 %v35
    %429 = vmatprep.subr.bf16.mxu0 0
    %430 = vmatpush1.bf16.msra.mxu0 0
    %431 = vmatprep.subr.bf16.mxu0 0
    %432 = vmatpush1.bf16.msra.mxu0 0
    %433 = vmatprep.subr.bf16.mxu0 0
    %434 = vmatpush1.bf16.msra.mxu0 0
    %435 = vmatprep.subr.bf16.mxu0 0
    %436 = vmatpush1.bf16.msra.mxu0 0
    %437 = vmatprep.subr.bf16.mxu0 0
    %438 = vmatpush1.bf16.msra.mxu0 0
    %439 = vmatprep.subr.bf16.mxu0 0
    %440 = vmatpush1.bf16.msra.mxu0 0
    %441 = vmatprep.subr.bf16.mxu0 0
    %442 = vmatpush1.bf16.msra.mxu0 0
    %443 = vmatprep.subr.bf16.mxu0 0
    %444 = vmatpush1.bf16.msra.mxu0 0
    %445 = vmatprep.subr.bf16.mxu0 0
    %446 = vmatpush1.bf16.msra.mxu0 0
    %447 = vmatprep.subr.bf16.mxu0 0
    %448 = vmatpush1.bf16.msra.mxu0 0
    %449 = vmatprep.subr.bf16.mxu0 0
    %450 = vmatpush1.bf16.msra.mxu0 0
    %451 = vmatprep.subr.bf16.mxu0 0
    %452 = vmatpush1.bf16.msra.mxu0 0
    %453 = vmatprep.subr.bf16.mxu0 0
    %454 = vmatpush1.bf16.msra.mxu0 0
    %455 = vmatprep.subr.bf16.mxu0 0
    %456 = vmatpush1.bf16.msra.mxu0 0
    %457 = vmatprep.mubr.bf16.mxu0 0
    %458 = vmatmul.mubr.bf16.gmra.mrb[0].mxu0 %v423
    %v459 = vpop.f32.mrb[0].mxu0
    %v460 = vadd.f32 0.0, %v459
    %v461 = vpop.f32.mrb[0].mxu0
    %v462 = vpop.f32.mrb[0].mxu0
    %v463 = vpop.f32.mrb[0].mxu0
    %464 = vdwg.mxu0
    %v465 = vadd.f32 %v118, %v460
    %v466 = vtanh.pop %v465
    %v467 = vmul.f32 %v466, 0.5
    %v468 = vadd.f32 %v467, 0.5
    %v469 = vmul.f32 %v468, %v411
    %471 = vrot.lane.b32.xlu0 %v466, 32
    %v472 = vpop.permute.xlu0 %471
    %v474 = vmul.f32 %v468, %v472
    %476 = vrot.lane.b32.xlu0 %v474, 32
    %v477 = vpop.permute.xlu0 %476
    %v479 = vadd.f32 %v469, %v477
    %v480 = vtanh.pop %v479
    %482 = vrot.lane.b32.xlu0 %v480, 32
    %v483 = vpop.permute.xlu0 %482
    %v485 = vmul.f32 %v468, %v483
    %v486 = vpack.c.bf16 %v485, %v485
    %488 = vrot.lane.b32.xlu0 %v486, 64
    %v489 = vpop.permute.xlu0 %488
    %v491 = vsel %vm145, %v489, 0
    %493 = vmatprep.subr.bf16.mxu0 0
    %494 = vmatpush1.bf16.msra.mxu0 %v34
    %495 = vmatprep.subr.bf16.mxu0 0
    %496 = vmatpush1.bf16.msra.mxu0 %v35
    %497 = vmatprep.subr.bf16.mxu0 0
    %498 = vmatpush1.bf16.msra.mxu0 0
    %499 = vmatprep.subr.bf16.mxu0 0
    %500 = vmatpush1.bf16.msra.mxu0 0
    %501 = vmatprep.subr.bf16.mxu0 0
    %502 = vmatpush1.bf16.msra.mxu0 0
    %503 = vmatprep.subr.bf16.mxu0 0
    %504 = vmatpush1.bf16.msra.mxu0 0
    %505 = vmatprep.subr.bf16.mxu0 0
    %506 = vmatpush1.bf16.msra.mxu0 0
    %507 = vmatprep.subr.bf16.mxu0 0
    %508 = vmatpush1.bf16.msra.mxu0 0
    %509 = vmatprep.subr.bf16.mxu0 0
    %510 = vmatpush1.bf16.msra.mxu0 0
    %511 = vmatprep.subr.bf16.mxu0 0
    %512 = vmatpush1.bf16.msra.mxu0 0
    %513 = vmatprep.subr.bf16.mxu0 0
    %514 = vmatpush1.bf16.msra.mxu0 0
    %515 = vmatprep.subr.bf16.mxu0 0
    %516 = vmatpush1.bf16.msra.mxu0 0
    %517 = vmatprep.subr.bf16.mxu0 0
    %518 = vmatpush1.bf16.msra.mxu0 0
    %519 = vmatprep.subr.bf16.mxu0 0
    %520 = vmatpush1.bf16.msra.mxu0 0
    %521 = vmatprep.subr.bf16.mxu0 0
    %522 = vmatpush1.bf16.msra.mxu0 0
    %523 = vmatprep.subr.bf16.mxu0 0
    %524 = vmatpush1.bf16.msra.mxu0 0
    %525 = vmatprep.mubr.bf16.mxu0 0
    %526 = vmatmul.mubr.bf16.gmra.mrb[0].mxu0 %v491
    %v527 = vpop.f32.mrb[0].mxu0
    %v528 = vadd.f32 0.0, %v527
    %v529 = vpop.f32.mrb[0].mxu0
    %v530 = vpop.f32.mrb[0].mxu0
    %v531 = vpop.f32.mrb[0].mxu0
    %532 = vdwg.mxu0
    %v533 = vadd.f32 %v122, %v528
    %v534 = vtanh.pop %v533
    %v535 = vmul.f32 %v534, 0.5
    %v536 = vadd.f32 %v535, 0.5
    %v537 = vmul.f32 %v536, %v479
    %539 = vrot.lane.b32.xlu0 %v534, 32
    %v540 = vpop.permute.xlu0 %539
    %v542 = vmul.f32 %v536, %v540
    %544 = vrot.lane.b32.xlu0 %v542, 32
    %v545 = vpop.permute.xlu0 %544
    %v547 = vadd.f32 %v537, %v545
    %v548 = vtanh.pop %v547
    %550 = vrot.lane.b32.xlu0 %v548, 32
    %v551 = vpop.permute.xlu0 %550
    %v553 = vmul.f32 %v536, %v551
    %v554 = vpack.c.bf16 %v553, %v553
    %556 = vrot.lane.b32.xlu0 %v554, 64
    %v557 = vpop.permute.xlu0 %556
    %v559 = vsel %vm145, %v557, 0
    %561 = vmatprep.subr.bf16.mxu0 0
    %562 = vmatpush1.bf16.msra.mxu0 %v34
    %563 = vmatprep.subr.bf16.mxu0 0
    %564 = vmatpush1.bf16.msra.mxu0 %v35
    %565 = vmatprep.subr.bf16.mxu0 0
    %566 = vmatpush1.bf16.msra.mxu0 0
    %567 = vmatprep.subr.bf16.mxu0 0
    %568 = vmatpush1.bf16.msra.mxu0 0
    %569 = vmatprep.subr.bf16.mxu0 0
    %570 = vmatpush1.bf16.msra.mxu0 0
    %571 = vmatprep.subr.bf16.mxu0 0
    %572 = vmatpush1.bf16.msra.mxu0 0
    %573 = vmatprep.subr.bf16.mxu0 0
    %574 = vmatpush1.bf16.msra.mxu0 0
    %575 = vmatprep.subr.bf16.mxu0 0
    %576 = vmatpush1.bf16.msra.mxu0 0
    %577 = vmatprep.subr.bf16.mxu0 0
    %578 = vmatpush1.bf16.msra.mxu0 0
    %579 = vmatprep.subr.bf16.mxu0 0
    %580 = vmatpush1.bf16.msra.mxu0 0
    %581 = vmatprep.subr.bf16.mxu0 0
    %582 = vmatpush1.bf16.msra.mxu0 0
    %583 = vmatprep.subr.bf16.mxu0 0
    %584 = vmatpush1.bf16.msra.mxu0 0
    %585 = vmatprep.subr.bf16.mxu0 0
    %586 = vmatpush1.bf16.msra.mxu0 0
    %587 = vmatprep.subr.bf16.mxu0 0
    %588 = vmatpush1.bf16.msra.mxu0 0
    %589 = vmatprep.subr.bf16.mxu0 0
    %590 = vmatpush1.bf16.msra.mxu0 0
    %591 = vmatprep.subr.bf16.mxu0 0
    %592 = vmatpush1.bf16.msra.mxu0 0
    %593 = vmatprep.mubr.bf16.mxu0 0
    %594 = vmatmul.mubr.bf16.gmra.mrb[0].mxu0 %v559
    %v595 = vpop.f32.mrb[0].mxu0
    %v596 = vadd.f32 0.0, %v595
    %v597 = vpop.f32.mrb[0].mxu0
    %v598 = vpop.f32.mrb[0].mxu0
    %v599 = vpop.f32.mrb[0].mxu0
    %600 = vdwg.mxu0
    %v601 = vadd.f32 %v126, %v596
    %v602 = vtanh.pop %v601
    %v603 = vmul.f32 %v602, 0.5
    %v604 = vadd.f32 %v603, 0.5
    %v605 = vmul.f32 %v604, %v547
    %607 = vrot.lane.b32.xlu0 %v602, 32
    %v608 = vpop.permute.xlu0 %607
    %v610 = vmul.f32 %v604, %v608
    %612 = vrot.lane.b32.xlu0 %v610, 32
    %v613 = vpop.permute.xlu0 %612
    %v615 = vadd.f32 %v605, %v613
    %v616 = vtanh.pop %v615
    %618 = vrot.lane.b32.xlu0 %v616, 32
    %v619 = vpop.permute.xlu0 %618
    %v621 = vmul.f32 %v604, %v619
    %623 = vrot.lane.b32.xlu0 %v140, 64
    %v624 = vpop.permute.xlu0 %623
    %627 = vrot.lane.b32.xlu0 %v621, 64
    %v628 = vpop.permute.xlu0 %627
    %vm630 = vcmask 130048
    %v631 = vsel %vm630, %v624, %v628
    %633 = vrot.lane.b32.xlu0 %v213, 64
    %v634 = vpop.permute.xlu0 %633
    %637 = vrot.lane.b32.xlu0 %v553, 64
    %v638 = vpop.permute.xlu0 %637
    %v640 = vsel %vm630, %v634, %v638
    %642 = vrot.lane.b32.xlu0 %v281, 64
    %v643 = vpop.permute.xlu0 %642
    %646 = vrot.lane.b32.xlu0 %v485, 64
    %v647 = vpop.permute.xlu0 %646
    %v649 = vsel %vm630, %v643, %v647
    %651 = vrot.lane.b32.xlu0 %v349, 64
    %v652 = vpop.permute.xlu0 %651
    %655 = vrot.lane.b32.xlu0 %v417, 64
    %v656 = vpop.permute.xlu0 %655
    %v658 = vsel %vm630, %v652, %v656
    %v659 = vsel %vm630, %v656, %v652
    %v660 = vsel %vm630, %v647, %v643
    %v661 = vsel %vm630, %v638, %v634
    %v662 = vsel %vm630, %v628, %v624
    %v664 = vrot.slane %v640, 6
    %v667 = vrot.slane %v649, 4
    %v670 = vrot.slane %v658, 2
    %v673 = vrot.slane %v660, 6
    %v676 = vrot.slane %v661, 4
    %v679 = vrot.slane %v662, 2
    %vm681 = vcmask 1041408
    %v682 = vsel %vm681, %v631, %v664
    %vm683 = vcmask 1043456
    %v684 = vsel %vm683, %v682, %v667
    %vm685 = vcmask 1045504
    %v686 = vsel %vm685, %v684, %v670
    %v687 = vsel %vm681, %v659, %v673
    %v688 = vsel %vm683, %v687, %v676
    %v689 = vsel %vm685, %v688, %v679
    %v690 = vlaneseq
    %v691 = vshrl.u32 %v690, 7
    %v692 = vsub.s32 0, %v691
    %v693 = vrot.slane %v43, %v692
    %v695 = vsel %vm145, %v686, 0
    %v698 = vsel %vm145, %v689, 0
    %700 = vmatprep.subr.mxu0 0.0
    %701 = vmatpush1.msra.mxu0 %v39
    %702 = vmatprep.subr.mxu0 0.0
    %703 = vmatpush1.msra.mxu0 %v40
    %704 = vmatprep.subr.mxu0 0.0
    %705 = vmatpush1.msra.mxu0 %v41
    %706 = vmatprep.subr.mxu0 0.0
    %707 = vmatpush1.msra.mxu0 %v42
    %708 = vmatprep.subr.mxu0 0.0
    %709 = vmatpush1.msra.mxu0 0.0
    %710 = vmatprep.subr.mxu0 0.0
    %711 = vmatpush1.msra.mxu0 0.0
    %712 = vmatprep.subr.mxu0 0.0
    %713 = vmatpush1.msra.mxu0 0.0
    %714 = vmatprep.subr.mxu0 0.0
    %715 = vmatpush1.msra.mxu0 0.0
    %716 = vmatprep.subr.mxu0 0.0
    %717 = vmatpush1.msra.mxu0 0.0
    %718 = vmatprep.subr.mxu0 0.0
    %719 = vmatpush1.msra.mxu0 0.0
    %720 = vmatprep.subr.mxu0 0.0
    %721 = vmatpush1.msra.mxu0 0.0
    %722 = vmatprep.subr.mxu0 0.0
    %723 = vmatpush1.msra.mxu0 0.0
    %724 = vmatprep.subr.mxu0 0.0
    %725 = vmatpush1.msra.mxu0 0.0
    %726 = vmatprep.subr.mxu0 0.0
    %727 = vmatpush1.msra.mxu0 0.0
    %728 = vmatprep.subr.mxu0 0.0
    %729 = vmatpush1.msra.mxu0 0.0
    %730 = vmatprep.subr.mxu0 0.0
    %731 = vmatpush1.msra.mxu0 0.0
    %732 = vmatprep.subr.mxu0 0.0
    %733 = vmatpush1.msra.mxu0 0.0
    %734 = vmatprep.subr.mxu0 0.0
    %735 = vmatpush1.msra.mxu0 0.0
    %736 = vmatprep.subr.mxu0 0.0
    %737 = vmatpush1.msra.mxu0 0.0
    %738 = vmatprep.subr.mxu0 0.0
    %739 = vmatpush1.msra.mxu0 0.0
    %740 = vmatprep.subr.mxu0 0.0
    %741 = vmatpush1.msra.mxu0 0.0
    %742 = vmatprep.subr.mxu0 0.0
    %743 = vmatpush1.msra.mxu0 0.0
    %744 = vmatprep.subr.mxu0 0.0
    %745 = vmatpush1.msra.mxu0 0.0
    %746 = vmatprep.subr.mxu0 0.0
    %747 = vmatpush1.msra.mxu0 0.0
    %748 = vmatprep.subr.mxu0 0.0
    %749 = vmatpush1.msra.mxu0 0.0
    %750 = vmatprep.subr.mxu0 0.0
    %751 = vmatpush1.msra.mxu0 0.0
    %752 = vmatprep.subr.mxu0 0.0
    %753 = vmatpush1.msra.mxu0 0.0
    %754 = vmatprep.subr.mxu0 0.0
    %755 = vmatpush1.msra.mxu0 0.0
    %756 = vmatprep.subr.mxu0 0.0
    %757 = vmatpush1.msra.mxu0 0.0
    %758 = vmatprep.subr.mxu0 0.0
    %759 = vmatpush1.msra.mxu0 0.0
    %760 = vmatprep.subr.mxu0 0.0
    %761 = vmatpush1.msra.mxu0 0.0
    %762 = vmatprep.subr.mxu0 0.0
    %763 = vmatpush1.msra.mxu0 0.0
    %764 = vmatprep.mubr.f32.mxu0 0.0
    %765 = vmatmul.mubr.f32.gmra.mrb[0].mxu0 %v695
    %v766 = vpop.f32.mrb[0].mxu0
    %v767 = vadd.f32 %v693, %v766
    %v768 = vpop.f32.mrb[0].mxu0
    %769 = vmatprep.mubr.f32.mxu0 0.0
    %770 = vmatmul.mubr.f32.gmra.mrb[0].mxu0 %v698
    %v771 = vpop.f32.mrb[0].mxu0
    %v772 = vadd.f32 %v693, %v771
    %v773 = vpop.f32.mrb[0].mxu0
    %774 = vdwg.mxu0
    %v775 = vtanh.pop %v767
    %v776 = vmul.f32 %v775, 0.5
    %v777 = vadd.f32 %v776, 0.5
    %779 = vrot.lane.b32.xlu0 %v775, 80
    %v780 = vpop.permute.xlu0 %779
    %v782 = vmul.f32 %v777, %v780
    %v783 = vtanh.pop %v782
    %785 = vrot.lane.b32.xlu0 %v783, 32
    %v786 = vpop.permute.xlu0 %785
    %v788 = vmul.f32 %v777, %v786
    %v789 = vpack.c.bf16 %v788, %v788
    %791 = vrot.lane.b32.xlu0 %v789, 96
    %v792 = vpop.permute.xlu0 %791
    %v794 = vsel %vm630, %v792, 0
    %796 = vmatprep.subr.bf16.mxu0 0
    %797 = vmatpush1.bf16.msra.mxu0 %v38
    %798 = vmatprep.subr.bf16.mxu0 0
    %799 = vmatpush1.bf16.msra.mxu0 0
    %800 = vmatprep.subr.bf16.mxu0 0
    %801 = vmatpush1.bf16.msra.mxu0 0
    %802 = vmatprep.subr.bf16.mxu0 0
    %803 = vmatpush1.bf16.msra.mxu0 0
    %804 = vmatprep.subr.bf16.mxu0 0
    %805 = vmatpush1.bf16.msra.mxu0 0
    %806 = vmatprep.subr.bf16.mxu0 0
    %807 = vmatpush1.bf16.msra.mxu0 0
    %808 = vmatprep.subr.bf16.mxu0 0
    %809 = vmatpush1.bf16.msra.mxu0 0
    %810 = vmatprep.subr.bf16.mxu0 0
    %811 = vmatpush1.bf16.msra.mxu0 0
    %812 = vmatprep.subr.bf16.mxu0 0
    %813 = vmatpush1.bf16.msra.mxu0 0
    %814 = vmatprep.subr.bf16.mxu0 0
    %815 = vmatpush1.bf16.msra.mxu0 0
    %816 = vmatprep.subr.bf16.mxu0 0
    %817 = vmatpush1.bf16.msra.mxu0 0
    %818 = vmatprep.subr.bf16.mxu0 0
    %819 = vmatpush1.bf16.msra.mxu0 0
    %820 = vmatprep.subr.bf16.mxu0 0
    %821 = vmatpush1.bf16.msra.mxu0 0
    %822 = vmatprep.subr.bf16.mxu0 0
    %823 = vmatpush1.bf16.msra.mxu0 0
    %824 = vmatprep.subr.bf16.mxu0 0
    %825 = vmatpush1.bf16.msra.mxu0 0
    %826 = vmatprep.subr.bf16.mxu0 0
    %827 = vmatpush1.bf16.msra.mxu0 0
    %828 = vmatprep.mubr.bf16.mxu0 0
    %829 = vmatmul.mubr.bf16.gmra.mrb[0].mxu0 %v794
    %v830 = vpop.f32.mrb[0].mxu0
    %v831 = vadd.f32 0.0, %v830
    %v832 = vpop.f32.mrb[0].mxu0
    %v833 = vpop.f32.mrb[0].mxu0
    %v834 = vpop.f32.mrb[0].mxu0
    %835 = vdwg.mxu0
    %v837 = vrot.slane %v831, 6
    %v839 = vadd.f32 %v767, %v837
    %v840 = vtanh.pop %v839
    %v841 = vmul.f32 %v840, 0.5
    %v842 = vadd.f32 %v841, 0.5
    %v844 = vrot.slane %v782, 6
    %845 = vrot.lane.b32.xlu0 %v844, 16
    %v846 = vpop.permute.xlu0 %845
    %v848 = vmul.f32 %v842, %v846
    %850 = vrot.lane.b32.xlu0 %v840, 80
    %v851 = vpop.permute.xlu0 %850
    %v853 = vmul.f32 %v842, %v851
    %855 = vrot.lane.b32.xlu0 %v853, 16
    %v856 = vpop.permute.xlu0 %855
    %v858 = vadd.f32 %v848, %v856
    %v859 = vtanh.pop %v858
    %861 = vrot.lane.b32.xlu0 %v859, 16
    %v862 = vpop.permute.xlu0 %861
    %v864 = vmul.f32 %v842, %v862
    %v865 = vpack.c.bf16 %v864, %v864
    %v867 = vrot.slane %v865, 1
    %868 = vrot.lane.b32.xlu0 %v867, 96
    %v869 = vpop.permute.xlu0 %868
    %v871 = vsel %vm630, %v869, 0
    %873 = vmatprep.subr.bf16.mxu0 0
    %874 = vmatpush1.bf16.msra.mxu0 %v38
    %875 = vmatprep.subr.bf16.mxu0 0
    %876 = vmatpush1.bf16.msra.mxu0 0
    %877 = vmatprep.subr.bf16.mxu0 0
    %878 = vmatpush1.bf16.msra.mxu0 0
    %879 = vmatprep.subr.bf16.mxu0 0
    %880 = vmatpush1.bf16.msra.mxu0 0
    %881 = vmatprep.subr.bf16.mxu0 0
    %882 = vmatpush1.bf16.msra.mxu0 0
    %883 = vmatprep.subr.bf16.mxu0 0
    %884 = vmatpush1.bf16.msra.mxu0 0
    %885 = vmatprep.subr.bf16.mxu0 0
    %886 = vmatpush1.bf16.msra.mxu0 0
    %887 = vmatprep.subr.bf16.mxu0 0
    %888 = vmatpush1.bf16.msra.mxu0 0
    %889 = vmatprep.subr.bf16.mxu0 0
    %890 = vmatpush1.bf16.msra.mxu0 0
    %891 = vmatprep.subr.bf16.mxu0 0
    %892 = vmatpush1.bf16.msra.mxu0 0
    %893 = vmatprep.subr.bf16.mxu0 0
    %894 = vmatpush1.bf16.msra.mxu0 0
    %895 = vmatprep.subr.bf16.mxu0 0
    %896 = vmatpush1.bf16.msra.mxu0 0
    %897 = vmatprep.subr.bf16.mxu0 0
    %898 = vmatpush1.bf16.msra.mxu0 0
    %899 = vmatprep.subr.bf16.mxu0 0
    %900 = vmatpush1.bf16.msra.mxu0 0
    %901 = vmatprep.subr.bf16.mxu0 0
    %902 = vmatpush1.bf16.msra.mxu0 0
    %903 = vmatprep.subr.bf16.mxu0 0
    %904 = vmatpush1.bf16.msra.mxu0 0
    %905 = vmatprep.mubr.bf16.mxu0 0
    %906 = vmatmul.mubr.bf16.gmra.mrb[0].mxu0 %v871
    %v907 = vpop.f32.mrb[0].mxu0
    %v908 = vadd.f32 0.0, %v907
    %v909 = vpop.f32.mrb[0].mxu0
    %v910 = vpop.f32.mrb[0].mxu0
    %v911 = vpop.f32.mrb[0].mxu0
    %912 = vdwg.mxu0
    %v914 = vrot.slane %v908, 4
    %v916 = vadd.f32 %v767, %v914
    %v917 = vtanh.pop %v916
    %v918 = vmul.f32 %v917, 0.5
    %v919 = vadd.f32 %v918, 0.5
    %v921 = vrot.slane %v858, 6
    %v923 = vmul.f32 %v919, %v921
    %925 = vrot.lane.b32.xlu0 %v917, 80
    %v926 = vpop.permute.xlu0 %925
    %v928 = vmul.f32 %v919, %v926
    %930 = vrot.lane.b32.xlu0 %v928, 16
    %v931 = vpop.permute.xlu0 %930
    %v933 = vadd.f32 %v923, %v931
    %v934 = vtanh.pop %v933
    %936 = vrot.lane.b32.xlu0 %v934, 16
    %v937 = vpop.permute.xlu0 %936
    %v939 = vmul.f32 %v919, %v937
    %v940 = vpack.c.bf16 %v939, %v939
    %v942 = vrot.slane %v940, 2
    %943 = vrot.lane.b32.xlu0 %v942, 96
    %v944 = vpop.permute.xlu0 %943
    %v946 = vsel %vm630, %v944, 0
    %948 = vmatprep.subr.bf16.mxu0 0
    %949 = vmatpush1.bf16.msra.mxu0 %v38
    %950 = vmatprep.subr.bf16.mxu0 0
    %951 = vmatpush1.bf16.msra.mxu0 0
    %952 = vmatprep.subr.bf16.mxu0 0
    %953 = vmatpush1.bf16.msra.mxu0 0
    %954 = vmatprep.subr.bf16.mxu0 0
    %955 = vmatpush1.bf16.msra.mxu0 0
    %956 = vmatprep.subr.bf16.mxu0 0
    %957 = vmatpush1.bf16.msra.mxu0 0
    %958 = vmatprep.subr.bf16.mxu0 0
    %959 = vmatpush1.bf16.msra.mxu0 0
    %960 = vmatprep.subr.bf16.mxu0 0
    %961 = vmatpush1.bf16.msra.mxu0 0
    %962 = vmatprep.subr.bf16.mxu0 0
    %963 = vmatpush1.bf16.msra.mxu0 0
    %964 = vmatprep.subr.bf16.mxu0 0
    %965 = vmatpush1.bf16.msra.mxu0 0
    %966 = vmatprep.subr.bf16.mxu0 0
    %967 = vmatpush1.bf16.msra.mxu0 0
    %968 = vmatprep.subr.bf16.mxu0 0
    %969 = vmatpush1.bf16.msra.mxu0 0
    %970 = vmatprep.subr.bf16.mxu0 0
    %971 = vmatpush1.bf16.msra.mxu0 0
    %972 = vmatprep.subr.bf16.mxu0 0
    %973 = vmatpush1.bf16.msra.mxu0 0
    %974 = vmatprep.subr.bf16.mxu0 0
    %975 = vmatpush1.bf16.msra.mxu0 0
    %976 = vmatprep.subr.bf16.mxu0 0
    %977 = vmatpush1.bf16.msra.mxu0 0
    %978 = vmatprep.subr.bf16.mxu0 0
    %979 = vmatpush1.bf16.msra.mxu0 0
    %980 = vmatprep.mubr.bf16.mxu0 0
    %981 = vmatmul.mubr.bf16.gmra.mrb[0].mxu0 %v946
    %v982 = vpop.f32.mrb[0].mxu0
    %v983 = vadd.f32 0.0, %v982
    %v984 = vpop.f32.mrb[0].mxu0
    %v985 = vpop.f32.mrb[0].mxu0
    %v986 = vpop.f32.mrb[0].mxu0
    %987 = vdwg.mxu0
    %v989 = vrot.slane %v983, 2
    %v991 = vadd.f32 %v767, %v989
    %v992 = vtanh.pop %v991
    %v993 = vmul.f32 %v992, 0.5
    %v994 = vadd.f32 %v993, 0.5
    %v996 = vrot.slane %v933, 6
    %v998 = vmul.f32 %v994, %v996
    %1000 = vrot.lane.b32.xlu0 %v992, 80
    %v1001 = vpop.permute.xlu0 %1000
    %v1003 = vmul.f32 %v994, %v1001
    %1005 = vrot.lane.b32.xlu0 %v1003, 16
    %v1006 = vpop.permute.xlu0 %1005
    %v1008 = vadd.f32 %v998, %v1006
    %v1009 = vtanh.pop %v1008
    %1011 = vrot.lane.b32.xlu0 %v1009, 16
    %v1012 = vpop.permute.xlu0 %1011
    %v1014 = vmul.f32 %v994, %v1012
    %v1015 = vpack.c.bf16 %v1014, %v1014
    %v1017 = vrot.slane %v1015, 3
    %1018 = vrot.lane.b32.xlu0 %v1017, 96
    %v1019 = vpop.permute.xlu0 %1018
    %v1021 = vsel %vm630, %v1019, 0
    %1023 = vmatprep.subr.bf16.mxu0 0
    %1024 = vmatpush1.bf16.msra.mxu0 %v38
    %1025 = vmatprep.subr.bf16.mxu0 0
    %1026 = vmatpush1.bf16.msra.mxu0 0
    %1027 = vmatprep.subr.bf16.mxu0 0
    %1028 = vmatpush1.bf16.msra.mxu0 0
    %1029 = vmatprep.subr.bf16.mxu0 0
    %1030 = vmatpush1.bf16.msra.mxu0 0
    %1031 = vmatprep.subr.bf16.mxu0 0
    %1032 = vmatpush1.bf16.msra.mxu0 0
    %1033 = vmatprep.subr.bf16.mxu0 0
    %1034 = vmatpush1.bf16.msra.mxu0 0
    %1035 = vmatprep.subr.bf16.mxu0 0
    %1036 = vmatpush1.bf16.msra.mxu0 0
    %1037 = vmatprep.subr.bf16.mxu0 0
    %1038 = vmatpush1.bf16.msra.mxu0 0
    %1039 = vmatprep.subr.bf16.mxu0 0
    %1040 = vmatpush1.bf16.msra.mxu0 0
    %1041 = vmatprep.subr.bf16.mxu0 0
    %1042 = vmatpush1.bf16.msra.mxu0 0
    %1043 = vmatprep.subr.bf16.mxu0 0
    %1044 = vmatpush1.bf16.msra.mxu0 0
    %1045 = vmatprep.subr.bf16.mxu0 0
    %1046 = vmatpush1.bf16.msra.mxu0 0
    %1047 = vmatprep.subr.bf16.mxu0 0
    %1048 = vmatpush1.bf16.msra.mxu0 0
    %1049 = vmatprep.subr.bf16.mxu0 0
    %1050 = vmatpush1.bf16.msra.mxu0 0
    %1051 = vmatprep.subr.bf16.mxu0 0
    %1052 = vmatpush1.bf16.msra.mxu0 0
    %1053 = vmatprep.subr.bf16.mxu0 0
    %1054 = vmatpush1.bf16.msra.mxu0 0
    %1055 = vmatprep.mubr.bf16.mxu0 0
    %1056 = vmatmul.mubr.bf16.gmra.mrb[0].mxu0 %v1021
    %v1057 = vpop.f32.mrb[0].mxu0
    %v1058 = vadd.f32 0.0, %v1057
    %v1059 = vpop.f32.mrb[0].mxu0
    %v1060 = vpop.f32.mrb[0].mxu0
    %v1061 = vpop.f32.mrb[0].mxu0
    %1062 = vdwg.mxu0
    %v1063 = vadd.f32 %v772, %v1058
    %v1064 = vtanh.pop %v1063
    %v1065 = vmul.f32 %v1064, 0.5
    %v1066 = vadd.f32 %v1065, 0.5
    %v1068 = vrot.slane %v1008, 6
    %v1070 = vmul.f32 %v1066, %v1068
    %1072 = vrot.lane.b32.xlu0 %v1064, 80
    %v1073 = vpop.permute.xlu0 %1072
    %v1075 = vmul.f32 %v1066, %v1073
    %1077 = vrot.lane.b32.xlu0 %v1075, 16
    %v1078 = vpop.permute.xlu0 %1077
    %v1080 = vadd.f32 %v1070, %v1078
    %v1081 = vtanh.pop %v1080
    %1083 = vrot.lane.b32.xlu0 %v1081, 16
    %v1084 = vpop.permute.xlu0 %1083
    %v1086 = vmul.f32 %v1066, %v1084
    %v1087 = vpack.c.bf16 %v1086, %v1086
    %1089 = vrot.lane.b32.xlu0 %v1087, 96
    %v1090 = vpop.permute.xlu0 %1089
    %v1092 = vsel %vm630, %v1090, 0
    %1094 = vmatprep.subr.bf16.mxu0 0
    %1095 = vmatpush1.bf16.msra.mxu0 %v38
    %1096 = vmatprep.subr.bf16.mxu0 0
    %1097 = vmatpush1.bf16.msra.mxu0 0
    %1098 = vmatprep.subr.bf16.mxu0 0
    %1099 = vmatpush1.bf16.msra.mxu0 0
    %1100 = vmatprep.subr.bf16.mxu0 0
    %1101 = vmatpush1.bf16.msra.mxu0 0
    %1102 = vmatprep.subr.bf16.mxu0 0
    %1103 = vmatpush1.bf16.msra.mxu0 0
    %1104 = vmatprep.subr.bf16.mxu0 0
    %1105 = vmatpush1.bf16.msra.mxu0 0
    %1106 = vmatprep.subr.bf16.mxu0 0
    %1107 = vmatpush1.bf16.msra.mxu0 0
    %1108 = vmatprep.subr.bf16.mxu0 0
    %1109 = vmatpush1.bf16.msra.mxu0 0
    %1110 = vmatprep.subr.bf16.mxu0 0
    %1111 = vmatpush1.bf16.msra.mxu0 0
    %1112 = vmatprep.subr.bf16.mxu0 0
    %1113 = vmatpush1.bf16.msra.mxu0 0
    %1114 = vmatprep.subr.bf16.mxu0 0
    %1115 = vmatpush1.bf16.msra.mxu0 0
    %1116 = vmatprep.subr.bf16.mxu0 0
    %1117 = vmatpush1.bf16.msra.mxu0 0
    %1118 = vmatprep.subr.bf16.mxu0 0
    %1119 = vmatpush1.bf16.msra.mxu0 0
    %1120 = vmatprep.subr.bf16.mxu0 0
    %1121 = vmatpush1.bf16.msra.mxu0 0
    %1122 = vmatprep.subr.bf16.mxu0 0
    %1123 = vmatpush1.bf16.msra.mxu0 0
    %1124 = vmatprep.subr.bf16.mxu0 0
    %1125 = vmatpush1.bf16.msra.mxu0 0
    %1126 = vmatprep.mubr.bf16.mxu0 0
    %1127 = vmatmul.mubr.bf16.gmra.mrb[0].mxu0 %v1092
    %v1128 = vpop.f32.mrb[0].mxu0
    %v1129 = vadd.f32 0.0, %v1128
    %v1130 = vpop.f32.mrb[0].mxu0
    %v1131 = vpop.f32.mrb[0].mxu0
    %v1132 = vpop.f32.mrb[0].mxu0
    %1133 = vdwg.mxu0
    %v1135 = vrot.slane %v1129, 6
    %v1137 = vadd.f32 %v772, %v1135
    %v1138 = vtanh.pop %v1137
    %v1139 = vmul.f32 %v1138, 0.5
    %v1140 = vadd.f32 %v1139, 0.5
    %v1142 = vrot.slane %v1080, 6
    %v1144 = vmul.f32 %v1140, %v1142
    %1146 = vrot.lane.b32.xlu0 %v1138, 80
    %v1147 = vpop.permute.xlu0 %1146
    %v1149 = vmul.f32 %v1140, %v1147
    %1151 = vrot.lane.b32.xlu0 %v1149, 16
    %v1152 = vpop.permute.xlu0 %1151
    %v1154 = vadd.f32 %v1144, %v1152
    %v1155 = vtanh.pop %v1154
    %1157 = vrot.lane.b32.xlu0 %v1155, 16
    %v1158 = vpop.permute.xlu0 %1157
    %v1160 = vmul.f32 %v1140, %v1158
    %v1161 = vpack.c.bf16 %v1160, %v1160
    %v1163 = vrot.slane %v1161, 1
    %1164 = vrot.lane.b32.xlu0 %v1163, 96
    %v1165 = vpop.permute.xlu0 %1164
    %v1167 = vsel %vm630, %v1165, 0
    %1169 = vmatprep.subr.bf16.mxu0 0
    %1170 = vmatpush1.bf16.msra.mxu0 %v38
    %1171 = vmatprep.subr.bf16.mxu0 0
    %1172 = vmatpush1.bf16.msra.mxu0 0
    %1173 = vmatprep.subr.bf16.mxu0 0
    %1174 = vmatpush1.bf16.msra.mxu0 0
    %1175 = vmatprep.subr.bf16.mxu0 0
    %1176 = vmatpush1.bf16.msra.mxu0 0
    %1177 = vmatprep.subr.bf16.mxu0 0
    %1178 = vmatpush1.bf16.msra.mxu0 0
    %1179 = vmatprep.subr.bf16.mxu0 0
    %1180 = vmatpush1.bf16.msra.mxu0 0
    %1181 = vmatprep.subr.bf16.mxu0 0
    %1182 = vmatpush1.bf16.msra.mxu0 0
    %1183 = vmatprep.subr.bf16.mxu0 0
    %1184 = vmatpush1.bf16.msra.mxu0 0
    %1185 = vmatprep.subr.bf16.mxu0 0
    %1186 = vmatpush1.bf16.msra.mxu0 0
    %1187 = vmatprep.subr.bf16.mxu0 0
    %1188 = vmatpush1.bf16.msra.mxu0 0
    %1189 = vmatprep.subr.bf16.mxu0 0
    %1190 = vmatpush1.bf16.msra.mxu0 0
    %1191 = vmatprep.subr.bf16.mxu0 0
    %1192 = vmatpush1.bf16.msra.mxu0 0
    %1193 = vmatprep.subr.bf16.mxu0 0
    %1194 = vmatpush1.bf16.msra.mxu0 0
    %1195 = vmatprep.subr.bf16.mxu0 0
    %1196 = vmatpush1.bf16.msra.mxu0 0
    %1197 = vmatprep.subr.bf16.mxu0 0
    %1198 = vmatpush1.bf16.msra.mxu0 0
    %1199 = vmatprep.subr.bf16.mxu0 0
    %1200 = vmatpush1.bf16.msra.mxu0 0
    %1201 = vmatprep.mubr.bf16.mxu0 0
    %1202 = vmatmul.mubr.bf16.gmra.mrb[0].mxu0 %v1167
    %v1203 = vpop.f32.mrb[0].mxu0
    %v1204 = vadd.f32 0.0, %v1203
    %v1205 = vpop.f32.mrb[0].mxu0
    %v1206 = vpop.f32.mrb[0].mxu0
    %v1207 = vpop.f32.mrb[0].mxu0
    %1208 = vdwg.mxu0
    %v1210 = vrot.slane %v1204, 4
    %v1212 = vadd.f32 %v772, %v1210
    %v1213 = vtanh.pop %v1212
    %v1214 = vmul.f32 %v1213, 0.5
    %v1215 = vadd.f32 %v1214, 0.5
    %v1217 = vrot.slane %v1154, 6
    %v1219 = vmul.f32 %v1215, %v1217
    %1221 = vrot.lane.b32.xlu0 %v1213, 80
    %v1222 = vpop.permute.xlu0 %1221
    %v1224 = vmul.f32 %v1215, %v1222
    %1226 = vrot.lane.b32.xlu0 %v1224, 16
    %v1227 = vpop.permute.xlu0 %1226
    %v1229 = vadd.f32 %v1219, %v1227
    %v1230 = vtanh.pop %v1229
    %1232 = vrot.lane.b32.xlu0 %v1230, 16
    %v1233 = vpop.permute.xlu0 %1232
    %v1235 = vmul.f32 %v1215, %v1233
    %v1236 = vpack.c.bf16 %v1235, %v1235
    %v1238 = vrot.slane %v1236, 2
    %1239 = vrot.lane.b32.xlu0 %v1238, 96
    %v1240 = vpop.permute.xlu0 %1239
    %v1242 = vsel %vm630, %v1240, 0
    %1244 = vmatprep.subr.bf16.mxu0 0
    %1245 = vmatpush1.bf16.msra.mxu0 %v38
    %1246 = vmatprep.subr.bf16.mxu0 0
    %1247 = vmatpush1.bf16.msra.mxu0 0
    %1248 = vmatprep.subr.bf16.mxu0 0
    %1249 = vmatpush1.bf16.msra.mxu0 0
    %1250 = vmatprep.subr.bf16.mxu0 0
    %1251 = vmatpush1.bf16.msra.mxu0 0
    %1252 = vmatprep.subr.bf16.mxu0 0
    %1253 = vmatpush1.bf16.msra.mxu0 0
    %1254 = vmatprep.subr.bf16.mxu0 0
    %1255 = vmatpush1.bf16.msra.mxu0 0
    %1256 = vmatprep.subr.bf16.mxu0 0
    %1257 = vmatpush1.bf16.msra.mxu0 0
    %1258 = vmatprep.subr.bf16.mxu0 0
    %1259 = vmatpush1.bf16.msra.mxu0 0
    %1260 = vmatprep.subr.bf16.mxu0 0
    %1261 = vmatpush1.bf16.msra.mxu0 0
    %1262 = vmatprep.subr.bf16.mxu0 0
    %1263 = vmatpush1.bf16.msra.mxu0 0
    %1264 = vmatprep.subr.bf16.mxu0 0
    %1265 = vmatpush1.bf16.msra.mxu0 0
    %1266 = vmatprep.subr.bf16.mxu0 0
    %1267 = vmatpush1.bf16.msra.mxu0 0
    %1268 = vmatprep.subr.bf16.mxu0 0
    %1269 = vmatpush1.bf16.msra.mxu0 0
    %1270 = vmatprep.subr.bf16.mxu0 0
    %1271 = vmatpush1.bf16.msra.mxu0 0
    %1272 = vmatprep.subr.bf16.mxu0 0
    %1273 = vmatpush1.bf16.msra.mxu0 0
    %1274 = vmatprep.subr.bf16.mxu0 0
    %1275 = vmatpush1.bf16.msra.mxu0 0
    %1276 = vmatprep.mubr.bf16.mxu0 0
    %1277 = vmatmul.mubr.bf16.gmra.mrb[0].mxu0 %v1242
    %v1278 = vpop.f32.mrb[0].mxu0
    %v1279 = vadd.f32 0.0, %v1278
    %v1280 = vpop.f32.mrb[0].mxu0
    %v1281 = vpop.f32.mrb[0].mxu0
    %v1282 = vpop.f32.mrb[0].mxu0
    %1283 = vdwg.mxu0
    %v1285 = vrot.slane %v1279, 2
    %v1287 = vadd.f32 %v772, %v1285
    %v1288 = vtanh.pop %v1287
    %v1289 = vmul.f32 %v1288, 0.5
    %v1290 = vadd.f32 %v1289, 0.5
    %v1292 = vrot.slane %v1229, 6
    %v1294 = vmul.f32 %v1290, %v1292
    %1296 = vrot.lane.b32.xlu0 %v1288, 80
    %v1297 = vpop.permute.xlu0 %1296
    %v1299 = vmul.f32 %v1290, %v1297
    %1301 = vrot.lane.b32.xlu0 %v1299, 16
    %v1302 = vpop.permute.xlu0 %1301
    %v1304 = vadd.f32 %v1294, %v1302
    %v1305 = vtanh.pop %v1304
    %1307 = vrot.lane.b32.xlu0 %v1305, 16
    %v1308 = vpop.permute.xlu0 %1307
    %v1310 = vmul.f32 %v1290, %v1308
    %v1311 = vtanh.pop %v772
    %v1312 = vmul.f32 %v1311, 0.5
    %v1313 = vadd.f32 %v1312, 0.5
    %1315 = vrot.lane.b32.xlu0 %v1311, 80
    %v1316 = vpop.permute.xlu0 %1315
    %v1318 = vmul.f32 %v1313, %v1316
    %v1319 = vtanh.pop %v1318
    %1321 = vrot.lane.b32.xlu0 %v1319, 32
    %v1322 = vpop.permute.xlu0 %1321
    %v1324 = vmul.f32 %v1313, %v1322
    %1326 = vrot.lane.b32.xlu0 %v1310, 96
    %v1327 = vpop.permute.xlu0 %1326
    %1330 = vrot.lane.b32.xlu0 %v1324, 48
    %v1331 = vpop.permute.xlu0 %1330
    %v1333 = vsel %vm630, %v1327, %v1331
    %v1334 = vlaneseq
    %v1335 = vshrl.u32 %v1334, 7
    %v1336 = vsub.s32 0, %v1335
    %v1337 = vrot.slane %v48, %v1336
    %v1339 = vrot.slane %v1333, 6
    %v1340 = vsel %vm145, %v1339, 0
    %1342 = vmatprep.subr.mxu0 0.0
    %1343 = vmatpush1.msra.mxu0 %v44
    %1344 = vmatprep.subr.mxu0 0.0
    %1345 = vmatpush1.msra.mxu0 %v45
    %1346 = vmatprep.subr.mxu0 0.0
    %1347 = vmatpush1.msra.mxu0 %v46
    %1348 = vmatprep.subr.mxu0 0.0
    %1349 = vmatpush1.msra.mxu0 %v47
    %1350 = vmatprep.subr.mxu0 0.0
    %1351 = vmatpush1.msra.mxu0 0.0
    %1352 = vmatprep.subr.mxu0 0.0
    %1353 = vmatpush1.msra.mxu0 0.0
    %1354 = vmatprep.subr.mxu0 0.0
    %1355 = vmatpush1.msra.mxu0 0.0
    %1356 = vmatprep.subr.mxu0 0.0
    %1357 = vmatpush1.msra.mxu0 0.0
    %1358 = vmatprep.subr.mxu0 0.0
    %1359 = vmatpush1.msra.mxu0 0.0
    %1360 = vmatprep.subr.mxu0 0.0
    %1361 = vmatpush1.msra.mxu0 0.0
    %1362 = vmatprep.subr.mxu0 0.0
    %1363 = vmatpush1.msra.mxu0 0.0
    %1364 = vmatprep.subr.mxu0 0.0
    %1365 = vmatpush1.msra.mxu0 0.0
    %1366 = vmatprep.subr.mxu0 0.0
    %1367 = vmatpush1.msra.mxu0 0.0
    %1368 = vmatprep.subr.mxu0 0.0
    %1369 = vmatpush1.msra.mxu0 0.0
    %1370 = vmatprep.subr.mxu0 0.0
    %1371 = vmatpush1.msra.mxu0 0.0
    %1372 = vmatprep.subr.mxu0 0.0
    %1373 = vmatpush1.msra.mxu0 0.0
    %1374 = vmatprep.subr.mxu0 0.0
    %1375 = vmatpush1.msra.mxu0 0.0
    %1376 = vmatprep.subr.mxu0 0.0
    %1377 = vmatpush1.msra.mxu0 0.0
    %1378 = vmatprep.subr.mxu0 0.0
    %1379 = vmatpush1.msra.mxu0 0.0
    %1380 = vmatprep.subr.mxu0 0.0
    %1381 = vmatpush1.msra.mxu0 0.0
    %1382 = vmatprep.subr.mxu0 0.0
    %1383 = vmatpush1.msra.mxu0 0.0
    %1384 = vmatprep.subr.mxu0 0.0
    %1385 = vmatpush1.msra.mxu0 0.0
    %1386 = vmatprep.subr.mxu0 0.0
    %1387 = vmatpush1.msra.mxu0 0.0
    %1388 = vmatprep.subr.mxu0 0.0
    %1389 = vmatpush1.msra.mxu0 0.0
    %1390 = vmatprep.subr.mxu0 0.0
    %1391 = vmatpush1.msra.mxu0 0.0
    %1392 = vmatprep.subr.mxu0 0.0
    %1393 = vmatpush1.msra.mxu0 0.0
    %1394 = vmatprep.subr.mxu0 0.0
    %1395 = vmatpush1.msra.mxu0 0.0
    %1396 = vmatprep.subr.mxu0 0.0
    %1397 = vmatpush1.msra.mxu0 0.0
    %1398 = vmatprep.subr.mxu0 0.0
    %1399 = vmatpush1.msra.mxu0 0.0
    %1400 = vmatprep.subr.mxu0 0.0
    %1401 = vmatpush1.msra.mxu0 0.0
    %1402 = vmatprep.subr.mxu0 0.0
    %1403 = vmatpush1.msra.mxu0 0.0
    %1404 = vmatprep.subr.mxu0 0.0
    %1405 = vmatpush1.msra.mxu0 0.0
    %1406 = vmatprep.mubr.f32.mxu0 0.0
    %1407 = vmatmul.mubr.f32.gmra.mrb[0].mxu0 %v1340
    %v1408 = vpop.f32.mrb[0].mxu0
    %v1409 = vadd.f32 %v1337, %v1408
    %v1410 = vpop.f32.mrb[0].mxu0
    %1411 = vdwg.mxu0
    %1412 = vst [vmem:[#allocation5] sm:$0x3] %v1409
    // Predicated region
    $region14: #{rnn_forward.1} parent=1 // pred_check
      _
    $region15: #{rnn_forward.1} parent=1 // pred_check_branch
      %1414 = sbr.rel (0) target = $region17
    $region16: #{rnn_forward.1} parent=1 // pred_region
      %s1416 = ssub.s32 32, 32
      %1417 = vsyncadd [#allocation4], %s1416
      %s1419 = sshll.u32 [#allocation5], 4
      %s1420 = int_to_ptr.vmem [resolvable:$true] %s1419
      %1422 = dma.vmem_to_hbm [thread:$0]  %s1420, 32, %s2, [#allocation4]
    $region17: #{rnn_forward.1} parent=1 // pred_fallthru
      _
    // Predicated region
    $region18: #{rnn_forward.1} parent=1 // pred_check
      _
    $region19: #{rnn_forward.1} parent=1 // pred_check_branch
      %1424 = sbr.rel (0) target = $region21
    $region20: #{rnn_forward.1} parent=1 // pred_region
      %1425 = dma.done [#allocation4], 32
    $region21: #{rnn_forward.1} parent=1 // pred_fallthru
      _
    %1426 = vsyncpa [#allocation3], 1
    %1427 = vsyncpa [#allocation4], 1

</llo_original>
